<compile_context>
chip_gen: v7x
topology: tpu7x:2x2x1
jax: 0.10.0
libtpu: 0.0.40
codegen_flags: <defaults>
</compile_context>

<pallas_src>
import jax
import jax.numpy as jnp
from jax.experimental import pallas as pl
from jax.experimental.pallas import tpu as pltpu

VOCAB = 2000
SEQ = 50
EMB = 32
IN_DIM = SEQ * EMB          # 1600
HIDDEN = 256
NUM_CLASSES = 10
CLASSES_PAD = 128           # lane-dense padded class dim
MAX_TM = 1024               # batch-tile cap (fits all generations w/ 32 MiB scoped VMEM)
NEG_BIG = -1e30             # exp(NEG_BIG - m) underflows to exactly 0 in f32


def _mlp_softmax_kernel(x_ref, w1_ref, b1_ref, w2_ref, b2_ref, o_ref):
    # dense1 (bf16 x bf16 -> f32 accumulate on the MXU) + bias + relu
    h = jnp.dot(x_ref[...], w1_ref[...], preferred_element_type=jnp.float32)
    h = jnp.maximum(h + b1_ref[...], 0.0)
    # dense2 over the 128-lane padded class dim (padded cols: W2=0, b2=-1e30)
    logits = jnp.dot(h, w2_ref[...], preferred_element_type=jnp.float32)
    logits = logits + b2_ref[...]
    # numerically-stable softmax; padded classes contribute exp(...)=0 exactly
    m = jnp.max(logits, axis=-1, keepdims=True)
    e = jnp.exp(logits - m)
    denom = jnp.sum(e, axis=-1, keepdims=True)
    # exact divide: rows sum to 1; cost is invisible under the DMA at [TM,128]
    o_ref[...] = (e / denom).astype(o_ref.dtype)


def recruitment3_forward(token_ids, params):
    """token_ids: [B, SEQ] int32. Returns [B, NUM_CLASSES] f32 softmax probs."""
    emb_table = params["emb"]
    w1, b1, w2, b2 = params["w1"], params["b1"], params["w2"], params["b2"]
    B = token_ids.shape[0]

    # --- glue (plain JAX): embedding lookup + flatten; dropout = identity (eval) ---
    x_emb = jnp.take(emb_table, token_ids, axis=0)                  # [B, SEQ, EMB] f32
    x_flat = x_emb.reshape(B, IN_DIM).astype(jnp.bfloat16)          # [B, 1600] bf16

    # --- pad the class dim to 128 lanes (zero W2 cols, -1e30 bias on padding) ---
    w2_p = jnp.zeros((HIDDEN, CLASSES_PAD), jnp.float32).at[:, :NUM_CLASSES].set(w2)
    b2_p = jnp.full((1, CLASSES_PAD), NEG_BIG, jnp.float32).at[:, :NUM_CLASSES].set(b2)

    # --- batch tiling: TM rows per grid step, weights resident across the grid ---
    tm = min(MAX_TM, ((B + 15) // 16) * 16)     # multiple of 16 (bf16 packs [16,128])
    num_tiles = pl.cdiv(B, tm)
    b_pad = num_tiles * tm
    if b_pad != B:
        x_flat = jnp.pad(x_flat, ((0, b_pad - B), (0, 0)))

    # Cross-core (megacore) split re-fetches W1 per TensorCore; only worth it once
    # activation traffic (B x 3.2 KB) clearly exceeds the extra ~0.8 MB W1 fetch.
    sem = (pltpu.PARALLEL,) if B >= 2048 else (pltpu.ARBITRARY,)

    bytes_accessed = (
        b_pad * IN_DIM * 2              # x (bf16)
        + IN_DIM * HIDDEN * 2           # W1 (bf16)
        + HIDDEN * 4                    # b1
        + HIDDEN * CLASSES_PAD * 4      # W2 (padded)
        + CLASSES_PAD * 4               # b2 (padded)
        + b_pad * CLASSES_PAD * 4       # out
    )
    cost = pl.CostEstimate(
        flops=2 * b_pad * IN_DIM * HIDDEN + 2 * b_pad * HIDDEN * CLASSES_PAD,
        transcendentals=b_pad * CLASSES_PAD,
        bytes_accessed=bytes_accessed,
    )

    out = pl.pallas_call(
        _mlp_softmax_kernel,
        out_shape=jax.ShapeDtypeStruct((b_pad, CLASSES_PAD), jnp.float32),
        grid=(num_tiles,),
        in_specs=[
            pl.BlockSpec((tm, IN_DIM), lambda i: (i, 0)),               # x tile (pipelined)
            pl.BlockSpec((IN_DIM, HIDDEN), lambda i: (0, 0)),           # W1: VMEM-resident
            pl.BlockSpec((1, HIDDEN), lambda i: (0, 0)),                # b1
            pl.BlockSpec((HIDDEN, CLASSES_PAD), lambda i: (0, 0)),      # W2 (padded)
            pl.BlockSpec((1, CLASSES_PAD), lambda i: (0, 0)),           # b2 (padded)
        ],
        out_specs=pl.BlockSpec((tm, CLASSES_PAD), lambda i: (i, 0)),    # lane-dense out
        compiler_params=pltpu.CompilerParams(
            dimension_semantics=sem,
            vmem_limit_bytes=32 * 1024 * 1024,
        ),
        cost_estimate=cost,
    )(x_flat, w1, b1, w2_p, b2_p)
    # slice off batch padding and the 118 padded class columns
    return out[:B, :NUM_CLASSES]


def recruitment3_reference(token_ids, params):
    """Pure-JAX f32 reference (same bf16-quantized W1 values, f32 math)."""
    B = token_ids.shape[0]
    x = jnp.take(params["emb"], token_ids, axis=0).reshape(B, IN_DIM)
    h = jnp.maximum(x @ params["w1"].astype(jnp.float32) + params["b1"], 0.0)
    logits = h @ params["w2"] + params["b2"]
    return jax.nn.softmax(logits, axis=-1)


def init_params(key):
    """Deterministic synthetic parameters matching the module's __init__ shapes."""
    k_emb, k_w1, k_b1, k_w2, k_b2 = jax.random.split(key, 5)
    emb = jax.random.normal(k_emb, (VOCAB, EMB), dtype=jnp.float32)
    # nn.Linear-style uniform(-1/sqrt(fan_in), 1/sqrt(fan_in)); stored as [in, out].
    bound1 = 1.0 / jnp.sqrt(jnp.float32(IN_DIM))
    w1 = jax.random.uniform(k_w1, (IN_DIM, HIDDEN), jnp.float32, -bound1, bound1)
    b1 = jax.random.uniform(k_b1, (1, HIDDEN), jnp.float32, -bound1, bound1)
    bound2 = 1.0 / jnp.sqrt(jnp.float32(HIDDEN))
    w2 = jax.random.uniform(k_w2, (HIDDEN, NUM_CLASSES), jnp.float32, -bound2, bound2)
    b2 = jax.random.uniform(k_b2, (1, NUM_CLASSES), jnp.float32, -bound2, bound2)
    return {
        "emb": emb,
        "w1": w1.astype(jnp.bfloat16),   # bf16 weights: half the dominant HBM DMA
        "b1": b1,
        "w2": w2,
        "b2": b2,
    }


if __name__ == "__main__":
    key = jax.random.PRNGKey(0)
    k_params, k_ids = jax.random.split(key)
    params = init_params(k_params)

    B = 8
    token_ids = jax.random.randint(k_ids, (B, SEQ), 0, VOCAB, dtype=jnp.int32)

    probs = recruitment3_forward(token_ids, params)
    probs = jax.block_until_ready(probs)

    # sanity: shape, rows sum to 1 (exact divide), matches f32 reference
    assert probs.shape == (B, NUM_CLASSES)
    row_sums = jnp.sum(probs, axis=-1)
    assert bool(jnp.all(jnp.abs(row_sums - 1.0) < 1e-4)), row_sums
    ref = recruitment3_reference(token_ids, params)
    assert bool(jnp.all(jnp.abs(probs - ref) < 1e-2)), jnp.max(jnp.abs(probs - ref))

    print("KERNEL_OK")
</pallas_src>

<mosaic_0001>
module attributes {stable_mosaic.version = 11 : i64} {
  func.func @_mlp_softmax_kernel(%arg0: i32, %arg1: memref<16x1600xbf16, #tpu.memory_space<vmem>>, %arg2: memref<1600x256xbf16, #tpu.memory_space<vmem>>, %arg3: memref<1x256xf32, #tpu.memory_space<vmem>>, %arg4: memref<256x128xf32, #tpu.memory_space<vmem>>, %arg5: memref<1x128xf32, #tpu.memory_space<vmem>>, %arg6: memref<16x128xf32, #tpu.memory_space<vmem>>) attributes {dimension_semantics = [#tpu.dimension_semantics<arbitrary>], iteration_bounds = array<i64: 1>, scalar_prefetch = 0 : i64, scratch_operands = 0 : i64, tpu.core_type = #tpu.core_type<tc>, window_params = [{transform_indices = @transform_0, window_bounds = array<i64: 16, 1600>}, {pipeline_mode = #tpu.pipeline_mode<synchronous>, transform_indices = @transform_1, window_bounds = array<i64: 1600, 256>}, {pipeline_mode = #tpu.pipeline_mode<synchronous>, transform_indices = @transform_2, window_bounds = array<i64: 1, 256>}, {pipeline_mode = #tpu.pipeline_mode<synchronous>, transform_indices = @transform_3, window_bounds = array<i64: 256, 128>}, {pipeline_mode = #tpu.pipeline_mode<synchronous>, transform_indices = @transform_4, window_bounds = array<i64: 1, 128>}, {transform_indices = @transform_5, window_bounds = array<i64: 16, 128>}]} {
    %c0 = arith.constant 0 : index
    %c0_0 = arith.constant 0 : index
    %0 = vector.load %arg1[%c0, %c0_0] : memref<16x1600xbf16, #tpu.memory_space<vmem>>, vector<16x1600xbf16>
    %c0_1 = arith.constant 0 : index
    %c0_2 = arith.constant 0 : index
    %1 = vector.load %arg2[%c0_1, %c0_2] : memref<1600x256xbf16, #tpu.memory_space<vmem>>, vector<1600x256xbf16>
    %cst = arith.constant dense<0.000000e+00> : vector<16x256xf32>
    %2 = tpu.matmul %0, %1, %cst {dimension_numbers = #tpu.dot_dimension_numbers<[1], [0], [0], [1], [0, 0, 1, 1], [], []>} : vector<16x1600xbf16>, vector<1600x256xbf16>, vector<16x256xf32> -> vector<16x256xf32>
    %c0_3 = arith.constant 0 : index
    %c0_4 = arith.constant 0 : index
    %3 = vector.load %arg3[%c0_3, %c0_4] : memref<1x256xf32, #tpu.memory_space<vmem>>, vector<1x256xf32>
    %4 = vector.broadcast %3 : vector<1x256xf32> to vector<16x256xf32>
    %5 = arith.addf %2, %4 : vector<16x256xf32>
    %cst_5 = arith.constant 0.000000e+00 : f32
    %6 = vector.broadcast %cst_5 : f32 to vector<16x256xf32>
    %7 = arith.maximumf %5, %6 : vector<16x256xf32>
    %c0_6 = arith.constant 0 : index
    %c0_7 = arith.constant 0 : index
    %8 = vector.load %arg4[%c0_6, %c0_7] : memref<256x128xf32, #tpu.memory_space<vmem>>, vector<256x128xf32>
    %cst_8 = arith.constant dense<0.000000e+00> : vector<16x128xf32>
    %9 = tpu.matmul %7, %8, %cst_8 {dimension_numbers = #tpu.dot_dimension_numbers<[1], [0], [0], [1], [0, 0, 1, 1], [], []>} : vector<16x256xf32>, vector<256x128xf32>, vector<16x128xf32> -> vector<16x128xf32>
    %c0_9 = arith.constant 0 : index
    %c0_10 = arith.constant 0 : index
    %10 = vector.load %arg5[%c0_9, %c0_10] : memref<1x128xf32, #tpu.memory_space<vmem>>, vector<1x128xf32>
    %11 = vector.broadcast %10 : vector<1x128xf32> to vector<16x128xf32>
    %12 = arith.addf %9, %11 : vector<16x128xf32>
    %cst_11 = arith.constant dense<0xFF800000> : vector<16xf32>
    %13 = vector.multi_reduction <maximumf>, %12, %cst_11 [1] : vector<16x128xf32> to vector<16xf32>
    %14 = vector.shape_cast %13 : vector<16xf32> to vector<16x1xf32>
    %15 = vector.broadcast %14 : vector<16x1xf32> to vector<16x128xf32>
    %16 = arith.subf %12, %15 : vector<16x128xf32>
    %17 = math.exp %16 : vector<16x128xf32>
    %cst_12 = arith.constant dense<0.000000e+00> : vector<16xf32>
    %18 = vector.multi_reduction <add>, %17, %cst_12 [1] : vector<16x128xf32> to vector<16xf32>
    %19 = vector.shape_cast %18 : vector<16xf32> to vector<16x1xf32>
    %20 = vector.broadcast %19 : vector<16x1xf32> to vector<16x128xf32>
    %21 = arith.divf %17, %20 : vector<16x128xf32>
    %c0_13 = arith.constant 0 : index
    %c0_14 = arith.constant 0 : index
    %22 = vector.load %arg6[%c0_13, %c0_14] : memref<16x128xf32, #tpu.memory_space<vmem>>, vector<16x128xf32>
    tpu.vector_store %arg6[%c0_13, %c0_14], %21 {strides = array<i32>} : memref<16x128xf32, #tpu.memory_space<vmem>>, vector<16x128xf32>,
    return
  }
  func.func @transform_0(%arg0: i32) -> (i32, i32) {
    %c0_i32 = arith.constant 0 : i32
    %c0_i32_0 = arith.constant 0 : i32
    return %arg0, %c0_i32 : i32, i32
  }
  func.func @transform_1(%arg0: i32) -> (i32, i32) {
    %c0_i32 = arith.constant 0 : i32
    %c0_i32_0 = arith.constant 0 : i32
    %c0_i32_1 = arith.constant 0 : i32
    return %c0_i32, %c0_i32_0 : i32, i32
  }
  func.func @transform_2(%arg0: i32) -> (i32, i32) {
    %c0_i32 = arith.constant 0 : i32
    %c0_i32_0 = arith.constant 0 : i32
    %c0_i32_1 = arith.constant 0 : i32
    return %c0_i32, %c0_i32_0 : i32, i32
  }
  func.func @transform_3(%arg0: i32) -> (i32, i32) {
    %c0_i32 = arith.constant 0 : i32
    %c0_i32_0 = arith.constant 0 : i32
    %c0_i32_1 = arith.constant 0 : i32
    return %c0_i32, %c0_i32_0 : i32, i32
  }
  func.func @transform_4(%arg0: i32) -> (i32, i32) {
    %c0_i32 = arith.constant 0 : i32
    %c0_i32_0 = arith.constant 0 : i32
    %c0_i32_1 = arith.constant 0 : i32
    return %c0_i32, %c0_i32_0 : i32, i32
  }
  func.func @transform_5(%arg0: i32) -> (i32, i32) {
    %c0_i32 = arith.constant 0 : i32
    %c0_i32_0 = arith.constant 0 : i32
    return %arg0, %c0_i32 : i32, i32
  }
}

</mosaic_0001>

<llo_original>
// kernel: tpu_custom_call.1
$region0: #{tpu_custom_call.1}
  #allocation0 [shape = 'u32[]', space=smem, size = 0x4, offset = 0x4, fixed_abs, tag = 'smem constant byte address 0x4 - core index']
  #allocation1 [shape = 'u32[144,128]{1,0:T(1,128)}', space=vmem, size = 0x12000, scoped, tag = 'internal scratch']
  %s0 = inlined_call_operand.hbm [shape: bf16[16,1600], index: 0, kind: input, shape index: {}]
  %s1 = inlined_call_operand.hbm [shape: bf16[1600,256], index: 1, kind: input, shape index: {}]
  %s2 = inlined_call_operand.vmem [shape: f32[1,256], index: 2, kind: input, shape index: {}]
  %s3 = inlined_call_operand.hbm [shape: f32[256,128], index: 3, kind: input, shape index: {}]
  %s4 = inlined_call_operand.vmem [shape: f32[1,128], index: 4, kind: input, shape index: {}]
  %s5 = inlined_call_operand.hbm [shape: f32[16,128], index: 5, kind: output, shape index: {}]
  %s6 = sld [smem:[#allocation0]]
  $region42: #{tpu_custom_call.1} parent=0
    _
  %s8 = ssub.s32 1, %s6
  %s9 = scalar_select 0, %s8, %s6
  $region1: #{tpu_custom_call.1} parent=0
    #allocation2 [shape = 'u8[53248]{0}', space=vmem, size = 0xd000, scoped, tag = 'input window, operand 0, single buffered']
    #allocation3 [shape = 's32[1]{0}', space=sflag, size = 0x4, scoped, tag = 'scoped memory for tpu_custom_call.1']
    #allocation4 [shape = 's32[1]{0}', space=sflag, size = 0x4, scoped, tag = 'scoped memory for tpu_custom_call.1']
    #allocation5 [shape = 'u8[819200]{0}', space=vmem, size = 0xc8000, scoped, tag = 'input window, operand 1, single buffered']
    #allocation6 [shape = 's32[1]{0}', space=sflag, size = 0x4, scoped, tag = 'scoped memory for tpu_custom_call.1']
    #allocation7 [shape = 'u8[131072]{0}', space=vmem, size = 0x20000, scoped, tag = 'input window, operand 3, single buffered']
    #allocation8 [shape = 'u8[8192]{0}', space=vmem, size = 0x2000, scoped, tag = 'output window, operand 0, single buffered']
    %10 = vsyncpa [#allocation3], 0
    %11 = vsyncpa [#allocation6], 0
    %12 = vsyncpa [#allocation4], 0
    // Predicated region
    $region2: #{tpu_custom_call.1} parent=1 // pred_check
      _
    $region3: #{tpu_custom_call.1} parent=1 // pred_check_branch
      %14 = sbr.rel (0) target = $region5
    $region4: #{tpu_custom_call.1} parent=1 // pred_region
      %s16 = ssub.s32 1664, 1664
      %17 = vsyncadd [#allocation3], %s16
      %s18 = sshll.u32 [#allocation2], 4
      %s19 = int_to_ptr.vmem [resolvable:$true] %s18
      %24 = dma.hbm_to_vmem [thread:$0]  %s0, 1664, %s19, [#allocation3], 832, 832, 52
    $region5: #{tpu_custom_call.1} parent=1 // pred_fallthru
      _
    // Predicated region
    $region6: #{tpu_custom_call.1} parent=1 // pred_check
      _
    $region7: #{tpu_custom_call.1} parent=1 // pred_check_branch
      %26 = sbr.rel (0) target = $region9
    $region8: #{tpu_custom_call.1} parent=1 // pred_region
      %s28 = ssub.s32 25600, 25600
      %29 = vsyncadd [#allocation6], %s28
      %s30 = sshll.u32 [#allocation5], 4
      %s31 = int_to_ptr.vmem [resolvable:$true] %s30
      %36 = dma.hbm_to_vmem [thread:$0]  %s1, 25600, %s31, [#allocation6], 128, 128, 8
    $region9: #{tpu_custom_call.1} parent=1 // pred_fallthru
      _
    // Predicated region
    $region10: #{tpu_custom_call.1} parent=1 // pred_check
      _
    $region11: #{tpu_custom_call.1} parent=1 // pred_check_branch
      %38 = sbr.rel (0) target = $region13
    $region12: #{tpu_custom_call.1} parent=1 // pred_region
      _
    $region13: #{tpu_custom_call.1} parent=1 // pred_fallthru
      _
    // Predicated region
    $region14: #{tpu_custom_call.1} parent=1 // pred_check
      _
    $region15: #{tpu_custom_call.1} parent=1 // pred_check_branch
      %40 = sbr.rel (0) target = $region17
    $region16: #{tpu_custom_call.1} parent=1 // pred_region
      %s42 = ssub.s32 4096, 4096
      %43 = vsyncadd [#allocation6], %s42
      %s44 = sshll.u32 [#allocation7], 4
      %s45 = int_to_ptr.vmem [resolvable:$true] %s44
      %50 = dma.hbm_to_vmem [thread:$0]  %s3, 4096, %s45, [#allocation6], 128, 128, 8
    $region17: #{tpu_custom_call.1} parent=1 // pred_fallthru
      _
    // Predicated region
    $region18: #{tpu_custom_call.1} parent=1 // pred_check
      _
    $region19: #{tpu_custom_call.1} parent=1 // pred_check_branch
      %52 = sbr.rel (0) target = $region21
    $region20: #{tpu_custom_call.1} parent=1 // pred_region
      _
    $region21: #{tpu_custom_call.1} parent=1 // pred_fallthru
      _
    // Predicated region
    $region22: #{tpu_custom_call.1} parent=1 // pred_check
      _
    $region23: #{tpu_custom_call.1} parent=1 // pred_check_branch
      %54 = sbr.rel (0) target = $region25
    $region24: #{tpu_custom_call.1} parent=1 // pred_region
      %55 = dma.done [#allocation3], 1664
    $region25: #{tpu_custom_call.1} parent=1 // pred_fallthru
      _
    // Predicated region
    $region26: #{tpu_custom_call.1} parent=1 // pred_check
      _
    $region27: #{tpu_custom_call.1} parent=1 // pred_check_branch
      %57 = sbr.rel (0) target = $region29
    $region28: #{tpu_custom_call.1} parent=1 // pred_region
      %58 = dma.done [#allocation6], 25600
    $region29: #{tpu_custom_call.1} parent=1 // pred_fallthru
      _
    // Predicated region
    $region30: #{tpu_custom_call.1} parent=1 // pred_check
      _
    $region31: #{tpu_custom_call.1} parent=1 // pred_check_branch
      %60 = sbr.rel (0) target = $region33
    $region32: #{tpu_custom_call.1} parent=1 // pred_region
      %61 = dma.done [#allocation6], 4096
    $region33: #{tpu_custom_call.1} parent=1 // pred_fallthru
      _
    %v63 = vld [vmem:[#allocation2] sm:$0xff]
    %v64 = vld [vmem:[#allocation2 + $0x8] sm:$0xff]
    %v65 = vld [vmem:[#allocation2 + $0x10] sm:$0xff]
    %v66 = vld [vmem:[#allocation2 + $0x18] sm:$0xff]
    %v67 = vld [vmem:[#allocation2 + $0x20] sm:$0xff]
    %v68 = vld [vmem:[#allocation2 + $0x28] sm:$0xff]
    %v69 = vld [vmem:[#allocation2 + $0x30] sm:$0xf]
    %v70 = vld [vmem:[#allocation2 + $0x34] sm:$0xff]
    %v71 = vld [vmem:[#allocation2 + $0x3c] sm:$0xff]
    %v72 = vld [vmem:[#allocation2 + $0x44] sm:$0xff]
    %v73 = vld [vmem:[#allocation2 + $0x4c] sm:$0xff]
    %v74 = vld [vmem:[#allocation2 + $0x54] sm:$0xff]
    %v75 = vld [vmem:[#allocation2 + $0x5c] sm:$0xff]
    %v76 = vld [vmem:[#allocation2 + $0x64] sm:$0xf]
    %v77 = vld [vmem:[#allocation5] sm:$0xff]
    %v78 = vld [vmem:[#allocation5 + $0x8] sm:$0xff]
    %v79 = vld [vmem:[#allocation5 + $0x10] sm:$0xff]
    %v80 = vld [vmem:[#allocation5 + $0x18] sm:$0xff]
    %v81 = vld [vmem:[#allocation5 + $0x20] sm:$0xff]
    %v82 = vld [vmem:[#allocation5 + $0x28] sm:$0xff]
    %v83 = vld [vmem:[#allocation5 + $0x30] sm:$0xff]
    %v84 = vld [vmem:[#allocation5 + $0x38] sm:$0xff]
    %v85 = vld [vmem:[#allocation5 + $0x40] sm:$0xff]
    %v86 = vld [vmem:[#allocation5 + $0x48] sm:$0xff]
    %v87 = vld [vmem:[#allocation5 + $0x50] sm:$0xff]
    %v88 = vld [vmem:[#allocation5 + $0x58] sm:$0xff]
    %v89 = vld [vmem:[#allocation5 + $0x60] sm:$0xff]
    %v90 = vld [vmem:[#allocation5 + $0x68] sm:$0xff]
    %v91 = vld [vmem:[#allocation5 + $0x70] sm:$0xff]
    %v92 = vld [vmem:[#allocation5 + $0x78] sm:$0xff]
    %v93 = vld [vmem:[#allocation5 + $0x80] sm:$0xff]
    %v94 = vld [vmem:[#allocation5 + $0x88] sm:$0xff]
    %v95 = vld [vmem:[#allocation5 + $0x90] sm:$0xff]
    %v96 = vld [vmem:[#allocation5 + $0x98] sm:$0xff]
    %v97 = vld [vmem:[#allocation5 + $0xa0] sm:$0xff]
    %v98 = vld [vmem:[#allocation5 + $0xa8] sm:$0xff]
    %v99 = vld [vmem:[#allocation5 + $0xb0] sm:$0xff]
    %v100 = vld [vmem:[#allocation5 + $0xb8] sm:$0xff]
    %v101 = vld [vmem:[#allocation5 + $0xc0] sm:$0xff]
    %v102 = vld [vmem:[#allocation5 + $0xc8] sm:$0xff]
    %v103 = vld [vmem:[#allocation5 + $0xd0] sm:$0xff]
    %v104 = vld [vmem:[#allocation5 + $0xd8] sm:$0xff]
    %v105 = vld [vmem:[#allocation5 + $0xe0] sm:$0xff]
    %v106 = vld [vmem:[#allocation5 + $0xe8] sm:$0xff]
    %v107 = vld [vmem:[#allocation5 + $0xf0] sm:$0xff]
    %v108 = vld [vmem:[#allocation5 + $0xf8] sm:$0xff]
    %v109 = vld [vmem:[#allocation5 + $0x100] sm:$0xff]
    %v110 = vld [vmem:[#allocation5 + $0x108] sm:$0xff]
    %v111 = vld [vmem:[#allocation5 + $0x110] sm:$0xff]
    %v112 = vld [vmem:[#allocation5 + $0x118] sm:$0xff]
    %v113 = vld [vmem:[#allocation5 + $0x120] sm:$0xff]
    %v114 = vld [vmem:[#allocation5 + $0x128] sm:$0xff]
    %v115 = vld [vmem:[#allocation5 + $0x130] sm:$0xff]
    %v116 = vld [vmem:[#allocation5 + $0x138] sm:$0xff]
    %v117 = vld [vmem:[#allocation5 + $0x140] sm:$0xff]
    %v118 = vld [vmem:[#allocation5 + $0x148] sm:$0xff]
    %v119 = vld [vmem:[#allocation5 + $0x150] sm:$0xff]
    %v120 = vld [vmem:[#allocation5 + $0x158] sm:$0xff]
    %v121 = vld [vmem:[#allocation5 + $0x160] sm:$0xff]
    %v122 = vld [vmem:[#allocation5 + $0x168] sm:$0xff]
    %v123 = vld [vmem:[#allocation5 + $0x170] sm:$0xff]
    %v124 = vld [vmem:[#allocation5 + $0x178] sm:$0xff]
    %v125 = vld [vmem:[#allocation5 + $0x180] sm:$0xff]
    %v126 = vld [vmem:[#allocation5 + $0x188] sm:$0xff]
    %v127 = vld [vmem:[#allocation5 + $0x190] sm:$0xff]
    %v128 = vld [vmem:[#allocation5 + $0x198] sm:$0xff]
    %v129 = vld [vmem:[#allocation5 + $0x1a0] sm:$0xff]
    %v130 = vld [vmem:[#allocation5 + $0x1a8] sm:$0xff]
    %v131 = vld [vmem:[#allocation5 + $0x1b0] sm:$0xff]
    %v132 = vld [vmem:[#allocation5 + $0x1b8] sm:$0xff]
    %v133 = vld [vmem:[#allocation5 + $0x1c0] sm:$0xff]
    %v134 = vld [vmem:[#allocation5 + $0x1c8] sm:$0xff]
    %v135 = vld [vmem:[#allocation5 + $0x1d0] sm:$0xff]
    %v136 = vld [vmem:[#allocation5 + $0x1d8] sm:$0xff]
    %v137 = vld [vmem:[#allocation5 + $0x1e0] sm:$0xff]
    %v138 = vld [vmem:[#allocation5 + $0x1e8] sm:$0xff]
    %v139 = vld [vmem:[#allocation5 + $0x1f0] sm:$0xff]
    %v140 = vld [vmem:[#allocation5 + $0x1f8] sm:$0xff]
    %v141 = vld [vmem:[#allocation5 + $0x200] sm:$0xff]
    %v142 = vld [vmem:[#allocation5 + $0x208] sm:$0xff]
    %v143 = vld [vmem:[#allocation5 + $0x210] sm:$0xff]
    %v144 = vld [vmem:[#allocation5 + $0x218] sm:$0xff]
    %v145 = vld [vmem:[#allocation5 + $0x220] sm:$0xff]
    %v146 = vld [vmem:[#allocation5 + $0x228] sm:$0xff]
    %v147 = vld [vmem:[#allocation5 + $0x230] sm:$0xff]
    %v148 = vld [vmem:[#allocation5 + $0x238] sm:$0xff]
    %v149 = vld [vmem:[#allocation5 + $0x240] sm:$0xff]
    %v150 = vld [vmem:[#allocation5 + $0x248] sm:$0xff]
    %v151 = vld [vmem:[#allocation5 + $0x250] sm:$0xff]
    %v152 = vld [vmem:[#allocation5 + $0x258] sm:$0xff]
    %v153 = vld [vmem:[#allocation5 + $0x260] sm:$0xff]
    %v154 = vld [vmem:[#allocation5 + $0x268] sm:$0xff]
    %v155 = vld [vmem:[#allocation5 + $0x270] sm:$0xff]
    %v156 = vld [vmem:[#allocation5 + $0x278] sm:$0xff]
    %v157 = vld [vmem:[#allocation5 + $0x280] sm:$0xff]
    %v158 = vld [vmem:[#allocation5 + $0x288] sm:$0xff]
    %v159 = vld [vmem:[#allocation5 + $0x290] sm:$0xff]
    %v160 = vld [vmem:[#allocation5 + $0x298] sm:$0xff]
    %v161 = vld [vmem:[#allocation5 + $0x2a0] sm:$0xff]
    %v162 = vld [vmem:[#allocation5 + $0x2a8] sm:$0xff]
    %v163 = vld [vmem:[#allocation5 + $0x2b0] sm:$0xff]
    %v164 = vld [vmem:[#allocation5 + $0x2b8] sm:$0xff]
    %v165 = vld [vmem:[#allocation5 + $0x2c0] sm:$0xff]
    %v166 = vld [vmem:[#allocation5 + $0x2c8] sm:$0xff]
    %v167 = vld [vmem:[#allocation5 + $0x2d0] sm:$0xff]
    %v168 = vld [vmem:[#allocation5 + $0x2d8] sm:$0xff]
    %v169 = vld [vmem:[#allocation5 + $0x2e0] sm:$0xff]
    %v170 = vld [vmem:[#allocation5 + $0x2e8] sm:$0xff]
    %v171 = vld [vmem:[#allocation5 + $0x2f0] sm:$0xff]
    %v172 = vld [vmem:[#allocation5 + $0x2f8] sm:$0xff]
    %v173 = vld [vmem:[#allocation5 + $0x300] sm:$0xff]
    %v174 = vld [vmem:[#allocation5 + $0x308] sm:$0xff]
    %v175 = vld [vmem:[#allocation5 + $0x310] sm:$0xff]
    %v176 = vld [vmem:[#allocation5 + $0x318] sm:$0xff]
    %v177 = vld [vmem:[#allocation5 + $0x320] sm:$0xff]
    %v178 = vld [vmem:[#allocation5 + $0x328] sm:$0xff]
    %v179 = vld [vmem:[#allocation5 + $0x330] sm:$0xff]
    %v180 = vld [vmem:[#allocation5 + $0x338] sm:$0xff]
    %v181 = vld [vmem:[#allocation5 + $0x340] sm:$0xff]
    %v182 = vld [vmem:[#allocation5 + $0x348] sm:$0xff]
    %v183 = vld [vmem:[#allocation5 + $0x350] sm:$0xff]
    %v184 = vld [vmem:[#allocation5 + $0x358] sm:$0xff]
    %v185 = vld [vmem:[#allocation5 + $0x360] sm:$0xff]
    %v186 = vld [vmem:[#allocation5 + $0x368] sm:$0xff]
    %v187 = vld [vmem:[#allocation5 + $0x370] sm:$0xff]
    %v188 = vld [vmem:[#allocation5 + $0x378] sm:$0xff]
    %v189 = vld [vmem:[#allocation5 + $0x380] sm:$0xff]
    %v190 = vld [vmem:[#allocation5 + $0x388] sm:$0xff]
    %v191 = vld [vmem:[#allocation5 + $0x390] sm:$0xff]
    %v192 = vld [vmem:[#allocation5 + $0x398] sm:$0xff]
    %v193 = vld [vmem:[#allocation5 + $0x3a0] sm:$0xff]
    %v194 = vld [vmem:[#allocation5 + $0x3a8] sm:$0xff]
    %v195 = vld [vmem:[#allocation5 + $0x3b0] sm:$0xff]
    %v196 = vld [vmem:[#allocation5 + $0x3b8] sm:$0xff]
    %v197 = vld [vmem:[#allocation5 + $0x3c0] sm:$0xff]
    %v198 = vld [vmem:[#allocation5 + $0x3c8] sm:$0xff]
    %v199 = vld [vmem:[#allocation5 + $0x3d0] sm:$0xff]
    %v200 = vld [vmem:[#allocation5 + $0x3d8] sm:$0xff]
    %v201 = vld [vmem:[#allocation5 + $0x3e0] sm:$0xff]
    %v202 = vld [vmem:[#allocation5 + $0x3e8] sm:$0xff]
    %v203 = vld [vmem:[#allocation5 + $0x3f0] sm:$0xff]
    %v204 = vld [vmem:[#allocation5 + $0x3f8] sm:$0xff]
    %v205 = vld [vmem:[#allocation5 + $0x400] sm:$0xff]
    %v206 = vld [vmem:[#allocation5 + $0x408] sm:$0xff]
    %v207 = vld [vmem:[#allocation5 + $0x410] sm:$0xff]
    %v208 = vld [vmem:[#allocation5 + $0x418] sm:$0xff]
    %v209 = vld [vmem:[#allocation5 + $0x420] sm:$0xff]
    %v210 = vld [vmem:[#allocation5 + $0x428] sm:$0xff]
    %v211 = vld [vmem:[#allocation5 + $0x430] sm:$0xff]
    %v212 = vld [vmem:[#allocation5 + $0x438] sm:$0xff]
    %v213 = vld [vmem:[#allocation5 + $0x440] sm:$0xff]
    %v214 = vld [vmem:[#allocation5 + $0x448] sm:$0xff]
    %v215 = vld [vmem:[#allocation5 + $0x450] sm:$0xff]
    %v216 = vld [vmem:[#allocation5 + $0x458] sm:$0xff]
    %v217 = vld [vmem:[#allocation5 + $0x460] sm:$0xff]
    %v218 = vld [vmem:[#allocation5 + $0x468] sm:$0xff]
    %v219 = vld [vmem:[#allocation5 + $0x470] sm:$0xff]
    %v220 = vld [vmem:[#allocation5 + $0x478] sm:$0xff]
    %v221 = vld [vmem:[#allocation5 + $0x480] sm:$0xff]
    %v222 = vld [vmem:[#allocation5 + $0x488] sm:$0xff]
    %v223 = vld [vmem:[#allocation5 + $0x490] sm:$0xff]
    %v224 = vld [vmem:[#allocation5 + $0x498] sm:$0xff]
    %v225 = vld [vmem:[#allocation5 + $0x4a0] sm:$0xff]
    %v226 = vld [vmem:[#allocation5 + $0x4a8] sm:$0xff]
    %v227 = vld [vmem:[#allocation5 + $0x4b0] sm:$0xff]
    %v228 = vld [vmem:[#allocation5 + $0x4b8] sm:$0xff]
    %v229 = vld [vmem:[#allocation5 + $0x4c0] sm:$0xff]
    %v230 = vld [vmem:[#allocation5 + $0x4c8] sm:$0xff]
    %v231 = vld [vmem:[#allocation5 + $0x4d0] sm:$0xff]
    %v232 = vld [vmem:[#allocation5 + $0x4d8] sm:$0xff]
    %v233 = vld [vmem:[#allocation5 + $0x4e0] sm:$0xff]
    %v234 = vld [vmem:[#allocation5 + $0x4e8] sm:$0xff]
    %v235 = vld [vmem:[#allocation5 + $0x4f0] sm:$0xff]
    %v236 = vld [vmem:[#allocation5 + $0x4f8] sm:$0xff]
    %v237 = vld [vmem:[#allocation5 + $0x500] sm:$0xff]
    %v238 = vld [vmem:[#allocation5 + $0x508] sm:$0xff]
    %v239 = vld [vmem:[#allocation5 + $0x510] sm:$0xff]
    %v240 = vld [vmem:[#allocation5 + $0x518] sm:$0xff]
    %v241 = vld [vmem:[#allocation5 + $0x520] sm:$0xff]
    %v242 = vld [vmem:[#allocation5 + $0x528] sm:$0xff]
    %v243 = vld [vmem:[#allocation5 + $0x530] sm:$0xff]
    %v244 = vld [vmem:[#allocation5 + $0x538] sm:$0xff]
    %v245 = vld [vmem:[#allocation5 + $0x540] sm:$0xff]
    %v246 = vld [vmem:[#allocation5 + $0x548] sm:$0xff]
    %v247 = vld [vmem:[#allocation5 + $0x550] sm:$0xff]
    %v248 = vld [vmem:[#allocation5 + $0x558] sm:$0xff]
    %v249 = vld [vmem:[#allocation5 + $0x560] sm:$0xff]
    %v250 = vld [vmem:[#allocation5 + $0x568] sm:$0xff]
    %v251 = vld [vmem:[#allocation5 + $0x570] sm:$0xff]
    %v252 = vld [vmem:[#allocation5 + $0x578] sm:$0xff]
    %v253 = vld [vmem:[#allocation5 + $0x580] sm:$0xff]
    %v254 = vld [vmem:[#allocation5 + $0x588] sm:$0xff]
    %v255 = vld [vmem:[#allocation5 + $0x590] sm:$0xff]
    %v256 = vld [vmem:[#allocation5 + $0x598] sm:$0xff]
    %v257 = vld [vmem:[#allocation5 + $0x5a0] sm:$0xff]
    %v258 = vld [vmem:[#allocation5 + $0x5a8] sm:$0xff]
    %v259 = vld [vmem:[#allocation5 + $0x5b0] sm:$0xff]
    %v260 = vld [vmem:[#allocation5 + $0x5b8] sm:$0xff]
    %v261 = vld [vmem:[#allocation5 + $0x5c0] sm:$0xff]
    %v262 = vld [vmem:[#allocation5 + $0x5c8] sm:$0xff]
    %v263 = vld [vmem:[#allocation5 + $0x5d0] sm:$0xff]
    %v264 = vld [vmem:[#allocation5 + $0x5d8] sm:$0xff]
    %v265 = vld [vmem:[#allocation5 + $0x5e0] sm:$0xff]
    %v266 = vld [vmem:[#allocation5 + $0x5e8] sm:$0xff]
    %v267 = vld [vmem:[#allocation5 + $0x5f0] sm:$0xff]
    %v268 = vld [vmem:[#allocation5 + $0x5f8] sm:$0xff]
    %v269 = vld [vmem:[#allocation5 + $0x600] sm:$0xff]
    %v270 = vld [vmem:[#allocation5 + $0x608] sm:$0xff]
    %v271 = vld [vmem:[#allocation5 + $0x610] sm:$0xff]
    %v272 = vld [vmem:[#allocation5 + $0x618] sm:$0xff]
    %v273 = vld [vmem:[#allocation5 + $0x620] sm:$0xff]
    %v274 = vld [vmem:[#allocation5 + $0x628] sm:$0xff]
    %v275 = vld [vmem:[#allocation5 + $0x630] sm:$0xff]
    %v276 = vld [vmem:[#allocation5 + $0x638] sm:$0xff]
    %v277 = vld [vmem:[%s2] sm:$0x3]
    %v279 = vlaneseq
    %v280 = vshrl.u32 %v279, 7
    %v281 = vsub.s32 0, %v280
    %v282 = vrot.slane %v277, %v281
    %v283 = vlaneseq
    %v284 = vshrl.u32 %v283, 7
    %v285 = vsub.s32 1, %v284
    %v286 = vrot.slane %v277, %v285
    %v303 = vunpack.c.l.b16 %v63
    %v304 = vunpack.c.h.b16 %v63
    %v305 = vunpack.c.l.b16 %v64
    %v306 = vunpack.c.h.b16 %v64
    %v307 = vunpack.c.l.b16 %v65
    %v308 = vunpack.c.h.b16 %v65
    %v309 = vunpack.c.l.b16 %v66
    %v310 = vunpack.c.h.b16 %v66
    %v311 = vunpack.c.l.b16 %v67
    %v312 = vunpack.c.h.b16 %v67
    %v313 = vunpack.c.l.b16 %v68
    %v314 = vunpack.c.h.b16 %v68
    %v315 = vunpack.c.l.b16 %v69
    %v316 = vunpack.c.l.b16 %v70
    %v317 = vunpack.c.h.b16 %v70
    %v318 = vunpack.c.l.b16 %v71
    %v319 = vunpack.c.h.b16 %v71
    %v320 = vunpack.c.l.b16 %v72
    %v321 = vunpack.c.h.b16 %v72
    %v322 = vunpack.c.l.b16 %v73
    %v323 = vunpack.c.h.b16 %v73
    %v324 = vunpack.c.l.b16 %v74
    %v325 = vunpack.c.h.b16 %v74
    %v326 = vunpack.c.l.b16 %v75
    %v327 = vunpack.c.h.b16 %v75
    %v328 = vunpack.c.l.b16 %v76
    %v329 = vpack.c.b16 %v316, %v303
    %v330 = vpack.c.b16 %v317, %v304
    %v331 = vpack.c.b16 %v318, %v305
    %v332 = vpack.c.b16 %v319, %v306
    %v333 = vpack.c.b16 %v320, %v307
    %v334 = vpack.c.b16 %v321, %v308
    %v335 = vpack.c.b16 %v322, %v309
    %v336 = vpack.c.b16 %v323, %v310
    %v337 = vpack.c.b16 %v324, %v311
    %v338 = vpack.c.b16 %v325, %v312
    %v339 = vpack.c.b16 %v326, %v313
    %v340 = vpack.c.b16 %v327, %v314
    %v341 = vpack.c.b16 %v328, %v315
    %v554 = vunpack.c.l.b16 %v77
    %v555 = vunpack.c.h.b16 %v77
    %v556 = vunpack.c.l.b16 %v78
    %v557 = vunpack.c.h.b16 %v78
    %v558 = vunpack.c.l.b16 %v79
    %v559 = vunpack.c.h.b16 %v79
    %v560 = vunpack.c.l.b16 %v80
    %v561 = vunpack.c.h.b16 %v80
    %v562 = vunpack.c.l.b16 %v81
    %v563 = vunpack.c.h.b16 %v81
    %v564 = vunpack.c.l.b16 %v82
    %v565 = vunpack.c.h.b16 %v82
    %v566 = vunpack.c.l.b16 %v83
    %v567 = vunpack.c.h.b16 %v83
    %v568 = vunpack.c.l.b16 %v84
    %v569 = vunpack.c.h.b16 %v84
    %v570 = vunpack.c.l.b16 %v85
    %v571 = vunpack.c.h.b16 %v85
    %v572 = vunpack.c.l.b16 %v86
    %v573 = vunpack.c.h.b16 %v86
    %v574 = vunpack.c.l.b16 %v87
    %v575 = vunpack.c.h.b16 %v87
    %v576 = vunpack.c.l.b16 %v88
    %v577 = vunpack.c.h.b16 %v88
    %v578 = vunpack.c.l.b16 %v89
    %v579 = vunpack.c.h.b16 %v89
    %v580 = vunpack.c.l.b16 %v90
    %v581 = vunpack.c.h.b16 %v90
    %v582 = vunpack.c.l.b16 %v91
    %v583 = vunpack.c.h.b16 %v91
    %v584 = vunpack.c.l.b16 %v92
    %v585 = vunpack.c.h.b16 %v92
    %v586 = vunpack.c.l.b16 %v93
    %v587 = vunpack.c.h.b16 %v93
    %v588 = vunpack.c.l.b16 %v94
    %v589 = vunpack.c.h.b16 %v94
    %v590 = vunpack.c.l.b16 %v95
    %v591 = vunpack.c.h.b16 %v95
    %v592 = vunpack.c.l.b16 %v96
    %v593 = vunpack.c.h.b16 %v96
    %v594 = vunpack.c.l.b16 %v97
    %v595 = vunpack.c.h.b16 %v97
    %v596 = vunpack.c.l.b16 %v98
    %v597 = vunpack.c.h.b16 %v98
    %v598 = vunpack.c.l.b16 %v99
    %v599 = vunpack.c.h.b16 %v99
    %v600 = vunpack.c.l.b16 %v100
    %v601 = vunpack.c.h.b16 %v100
    %v602 = vunpack.c.l.b16 %v101
    %v603 = vunpack.c.h.b16 %v101
    %v604 = vunpack.c.l.b16 %v102
    %v605 = vunpack.c.h.b16 %v102
    %v606 = vunpack.c.l.b16 %v103
    %v607 = vunpack.c.h.b16 %v103
    %v608 = vunpack.c.l.b16 %v104
    %v609 = vunpack.c.h.b16 %v104
    %v610 = vunpack.c.l.b16 %v105
    %v611 = vunpack.c.h.b16 %v105
    %v612 = vunpack.c.l.b16 %v106
    %v613 = vunpack.c.h.b16 %v106
    %v614 = vunpack.c.l.b16 %v107
    %v615 = vunpack.c.h.b16 %v107
    %v616 = vunpack.c.l.b16 %v108
    %v617 = vunpack.c.h.b16 %v108
    %v618 = vunpack.c.l.b16 %v109
    %v619 = vunpack.c.h.b16 %v109
    %v620 = vunpack.c.l.b16 %v110
    %v621 = vunpack.c.h.b16 %v110
    %v622 = vunpack.c.l.b16 %v111
    %v623 = vunpack.c.h.b16 %v111
    %v624 = vunpack.c.l.b16 %v112
    %v625 = vunpack.c.h.b16 %v112
    %v626 = vunpack.c.l.b16 %v113
    %v627 = vunpack.c.h.b16 %v113
    %v628 = vunpack.c.l.b16 %v114
    %v629 = vunpack.c.h.b16 %v114
    %v630 = vunpack.c.l.b16 %v115
    %v631 = vunpack.c.h.b16 %v115
    %v632 = vunpack.c.l.b16 %v116
    %v633 = vunpack.c.h.b16 %v116
    %v634 = vunpack.c.l.b16 %v117
    %v635 = vunpack.c.h.b16 %v117
    %v636 = vunpack.c.l.b16 %v118
    %v637 = vunpack.c.h.b16 %v118
    %v638 = vunpack.c.l.b16 %v119
    %v639 = vunpack.c.h.b16 %v119
    %v640 = vunpack.c.l.b16 %v120
    %v641 = vunpack.c.h.b16 %v120
    %v642 = vunpack.c.l.b16 %v121
    %v643 = vunpack.c.h.b16 %v121
    %v644 = vunpack.c.l.b16 %v122
    %v645 = vunpack.c.h.b16 %v122
    %v646 = vunpack.c.l.b16 %v123
    %v647 = vunpack.c.h.b16 %v123
    %v648 = vunpack.c.l.b16 %v124
    %v649 = vunpack.c.h.b16 %v124
    %v650 = vunpack.c.l.b16 %v125
    %v651 = vunpack.c.h.b16 %v125
    %v652 = vunpack.c.l.b16 %v126
    %v653 = vunpack.c.h.b16 %v126
    %v654 = vunpack.c.l.b16 %v127
    %v655 = vunpack.c.h.b16 %v127
    %v656 = vunpack.c.l.b16 %v128
    %v657 = vunpack.c.h.b16 %v128
    %v658 = vunpack.c.l.b16 %v129
    %v659 = vunpack.c.h.b16 %v129
    %v660 = vunpack.c.l.b16 %v130
    %v661 = vunpack.c.h.b16 %v130
    %v662 = vunpack.c.l.b16 %v131
    %v663 = vunpack.c.h.b16 %v131
    %v664 = vunpack.c.l.b16 %v132
    %v665 = vunpack.c.h.b16 %v132
    %v666 = vunpack.c.l.b16 %v133
    %v667 = vunpack.c.h.b16 %v133
    %v668 = vunpack.c.l.b16 %v134
    %v669 = vunpack.c.h.b16 %v134
    %v670 = vunpack.c.l.b16 %v135
    %v671 = vunpack.c.h.b16 %v135
    %v672 = vunpack.c.l.b16 %v136
    %v673 = vunpack.c.h.b16 %v136
    %v674 = vunpack.c.l.b16 %v137
    %v675 = vunpack.c.h.b16 %v137
    %v676 = vunpack.c.l.b16 %v138
    %v677 = vunpack.c.h.b16 %v138
    %v678 = vunpack.c.l.b16 %v139
    %v679 = vunpack.c.h.b16 %v139
    %v680 = vunpack.c.l.b16 %v140
    %v681 = vunpack.c.h.b16 %v140
    %v682 = vunpack.c.l.b16 %v141
    %v683 = vunpack.c.h.b16 %v141
    %v684 = vunpack.c.l.b16 %v142
    %v685 = vunpack.c.h.b16 %v142
    %v686 = vunpack.c.l.b16 %v143
    %v687 = vunpack.c.h.b16 %v143
    %v688 = vunpack.c.l.b16 %v144
    %v689 = vunpack.c.h.b16 %v144
    %v690 = vunpack.c.l.b16 %v145
    %v691 = vunpack.c.h.b16 %v145
    %v692 = vunpack.c.l.b16 %v146
    %v693 = vunpack.c.h.b16 %v146
    %v694 = vunpack.c.l.b16 %v147
    %v695 = vunpack.c.h.b16 %v147
    %v696 = vunpack.c.l.b16 %v148
    %v697 = vunpack.c.h.b16 %v148
    %v698 = vunpack.c.l.b16 %v149
    %v699 = vunpack.c.h.b16 %v149
    %v700 = vunpack.c.l.b16 %v150
    %v701 = vunpack.c.h.b16 %v150
    %v702 = vunpack.c.l.b16 %v151
    %v703 = vunpack.c.h.b16 %v151
    %v704 = vunpack.c.l.b16 %v152
    %v705 = vunpack.c.h.b16 %v152
    %v706 = vunpack.c.l.b16 %v153
    %v707 = vunpack.c.h.b16 %v153
    %v708 = vunpack.c.l.b16 %v154
    %v709 = vunpack.c.h.b16 %v154
    %v710 = vunpack.c.l.b16 %v155
    %v711 = vunpack.c.h.b16 %v155
    %v712 = vunpack.c.l.b16 %v156
    %v713 = vunpack.c.h.b16 %v156
    %v714 = vunpack.c.l.b16 %v157
    %v715 = vunpack.c.h.b16 %v157
    %v716 = vunpack.c.l.b16 %v158
    %v717 = vunpack.c.h.b16 %v158
    %v718 = vunpack.c.l.b16 %v159
    %v719 = vunpack.c.h.b16 %v159
    %v720 = vunpack.c.l.b16 %v160
    %v721 = vunpack.c.h.b16 %v160
    %v722 = vunpack.c.l.b16 %v161
    %v723 = vunpack.c.h.b16 %v161
    %v724 = vunpack.c.l.b16 %v162
    %v725 = vunpack.c.h.b16 %v162
    %v726 = vunpack.c.l.b16 %v163
    %v727 = vunpack.c.h.b16 %v163
    %v728 = vunpack.c.l.b16 %v164
    %v729 = vunpack.c.h.b16 %v164
    %v730 = vunpack.c.l.b16 %v165
    %v731 = vunpack.c.h.b16 %v165
    %v732 = vunpack.c.l.b16 %v166
    %v733 = vunpack.c.h.b16 %v166
    %v734 = vunpack.c.l.b16 %v167
    %v735 = vunpack.c.h.b16 %v167
    %v736 = vunpack.c.l.b16 %v168
    %v737 = vunpack.c.h.b16 %v168
    %v738 = vunpack.c.l.b16 %v169
    %v739 = vunpack.c.h.b16 %v169
    %v740 = vunpack.c.l.b16 %v170
    %v741 = vunpack.c.h.b16 %v170
    %v742 = vunpack.c.l.b16 %v171
    %v743 = vunpack.c.h.b16 %v171
    %v744 = vunpack.c.l.b16 %v172
    %v745 = vunpack.c.h.b16 %v172
    %v746 = vunpack.c.l.b16 %v173
    %v747 = vunpack.c.h.b16 %v173
    %v748 = vunpack.c.l.b16 %v174
    %v749 = vunpack.c.h.b16 %v174
    %v750 = vunpack.c.l.b16 %v175
    %v751 = vunpack.c.h.b16 %v175
    %v752 = vunpack.c.l.b16 %v176
    %v753 = vunpack.c.h.b16 %v176
    %v754 = vunpack.c.l.b16 %v177
    %v755 = vunpack.c.h.b16 %v177
    %v756 = vunpack.c.l.b16 %v178
    %v757 = vunpack.c.h.b16 %v178
    %v758 = vunpack.c.l.b16 %v179
    %v759 = vunpack.c.h.b16 %v179
    %v760 = vunpack.c.l.b16 %v180
    %v761 = vunpack.c.h.b16 %v180
    %v762 = vunpack.c.l.b16 %v181
    %v763 = vunpack.c.h.b16 %v181
    %v764 = vunpack.c.l.b16 %v182
    %v765 = vunpack.c.h.b16 %v182
    %v766 = vunpack.c.l.b16 %v183
    %v767 = vunpack.c.h.b16 %v183
    %v768 = vunpack.c.l.b16 %v184
    %v769 = vunpack.c.h.b16 %v184
    %v770 = vunpack.c.l.b16 %v185
    %v771 = vunpack.c.h.b16 %v185
    %v772 = vunpack.c.l.b16 %v186
    %v773 = vunpack.c.h.b16 %v186
    %v774 = vunpack.c.l.b16 %v187
    %v775 = vunpack.c.h.b16 %v187
    %v776 = vunpack.c.l.b16 %v188
    %v777 = vunpack.c.h.b16 %v188
    %v778 = vunpack.c.l.b16 %v189
    %v779 = vunpack.c.h.b16 %v189
    %v780 = vunpack.c.l.b16 %v190
    %v781 = vunpack.c.h.b16 %v190
    %v782 = vunpack.c.l.b16 %v191
    %v783 = vunpack.c.h.b16 %v191
    %v784 = vunpack.c.l.b16 %v192
    %v785 = vunpack.c.h.b16 %v192
    %v786 = vunpack.c.l.b16 %v193
    %v787 = vunpack.c.h.b16 %v193
    %v788 = vunpack.c.l.b16 %v194
    %v789 = vunpack.c.h.b16 %v194
    %v790 = vunpack.c.l.b16 %v195
    %v791 = vunpack.c.h.b16 %v195
    %v792 = vunpack.c.l.b16 %v196
    %v793 = vunpack.c.h.b16 %v196
    %v794 = vunpack.c.l.b16 %v197
    %v795 = vunpack.c.h.b16 %v197
    %v796 = vunpack.c.l.b16 %v198
    %v797 = vunpack.c.h.b16 %v198
    %v798 = vunpack.c.l.b16 %v199
    %v799 = vunpack.c.h.b16 %v199
    %v800 = vunpack.c.l.b16 %v200
    %v801 = vunpack.c.h.b16 %v200
    %v802 = vunpack.c.l.b16 %v201
    %v803 = vunpack.c.h.b16 %v201
    %v804 = vunpack.c.l.b16 %v202
    %v805 = vunpack.c.h.b16 %v202
    %v806 = vunpack.c.l.b16 %v203
    %v807 = vunpack.c.h.b16 %v203
    %v808 = vunpack.c.l.b16 %v204
    %v809 = vunpack.c.h.b16 %v204
    %v810 = vunpack.c.l.b16 %v205
    %v811 = vunpack.c.h.b16 %v205
    %v812 = vunpack.c.l.b16 %v206
    %v813 = vunpack.c.h.b16 %v206
    %v814 = vunpack.c.l.b16 %v207
    %v815 = vunpack.c.h.b16 %v207
    %v816 = vunpack.c.l.b16 %v208
    %v817 = vunpack.c.h.b16 %v208
    %v818 = vunpack.c.l.b16 %v209
    %v819 = vunpack.c.h.b16 %v209
    %v820 = vunpack.c.l.b16 %v210
    %v821 = vunpack.c.h.b16 %v210
    %v822 = vunpack.c.l.b16 %v211
    %v823 = vunpack.c.h.b16 %v211
    %v824 = vunpack.c.l.b16 %v212
    %v825 = vunpack.c.h.b16 %v212
    %v826 = vunpack.c.l.b16 %v213
    %v827 = vunpack.c.h.b16 %v213
    %v828 = vunpack.c.l.b16 %v214
    %v829 = vunpack.c.h.b16 %v214
    %v830 = vunpack.c.l.b16 %v215
    %v831 = vunpack.c.h.b16 %v215
    %v832 = vunpack.c.l.b16 %v216
    %v833 = vunpack.c.h.b16 %v216
    %v834 = vunpack.c.l.b16 %v217
    %v835 = vunpack.c.h.b16 %v217
    %v836 = vunpack.c.l.b16 %v218
    %v837 = vunpack.c.h.b16 %v218
    %v838 = vunpack.c.l.b16 %v219
    %v839 = vunpack.c.h.b16 %v219
    %v840 = vunpack.c.l.b16 %v220
    %v841 = vunpack.c.h.b16 %v220
    %v842 = vunpack.c.l.b16 %v221
    %v843 = vunpack.c.h.b16 %v221
    %v844 = vunpack.c.l.b16 %v222
    %v845 = vunpack.c.h.b16 %v222
    %v846 = vunpack.c.l.b16 %v223
    %v847 = vunpack.c.h.b16 %v223
    %v848 = vunpack.c.l.b16 %v224
    %v849 = vunpack.c.h.b16 %v224
    %v850 = vunpack.c.l.b16 %v225
    %v851 = vunpack.c.h.b16 %v225
    %v852 = vunpack.c.l.b16 %v226
    %v853 = vunpack.c.h.b16 %v226
    %v854 = vunpack.c.l.b16 %v227
    %v855 = vunpack.c.h.b16 %v227
    %v856 = vunpack.c.l.b16 %v228
    %v857 = vunpack.c.h.b16 %v228
    %v858 = vunpack.c.l.b16 %v229
    %v859 = vunpack.c.h.b16 %v229
    %v860 = vunpack.c.l.b16 %v230
    %v861 = vunpack.c.h.b16 %v230
    %v862 = vunpack.c.l.b16 %v231
    %v863 = vunpack.c.h.b16 %v231
    %v864 = vunpack.c.l.b16 %v232
    %v865 = vunpack.c.h.b16 %v232
    %v866 = vunpack.c.l.b16 %v233
    %v867 = vunpack.c.h.b16 %v233
    %v868 = vunpack.c.l.b16 %v234
    %v869 = vunpack.c.h.b16 %v234
    %v870 = vunpack.c.l.b16 %v235
    %v871 = vunpack.c.h.b16 %v235
    %v872 = vunpack.c.l.b16 %v236
    %v873 = vunpack.c.h.b16 %v236
    %v874 = vunpack.c.l.b16 %v237
    %v875 = vunpack.c.h.b16 %v237
    %v876 = vunpack.c.l.b16 %v238
    %v877 = vunpack.c.h.b16 %v238
    %v878 = vunpack.c.l.b16 %v239
    %v879 = vunpack.c.h.b16 %v239
    %v880 = vunpack.c.l.b16 %v240
    %v881 = vunpack.c.h.b16 %v240
    %v882 = vunpack.c.l.b16 %v241
    %v883 = vunpack.c.h.b16 %v241
    %v884 = vunpack.c.l.b16 %v242
    %v885 = vunpack.c.h.b16 %v242
    %v886 = vunpack.c.l.b16 %v243
    %v887 = vunpack.c.h.b16 %v243
    %v888 = vunpack.c.l.b16 %v244
    %v889 = vunpack.c.h.b16 %v244
    %v890 = vunpack.c.l.b16 %v245
    %v891 = vunpack.c.h.b16 %v245
    %v892 = vunpack.c.l.b16 %v246
    %v893 = vunpack.c.h.b16 %v246
    %v894 = vunpack.c.l.b16 %v247
    %v895 = vunpack.c.h.b16 %v247
    %v896 = vunpack.c.l.b16 %v248
    %v897 = vunpack.c.h.b16 %v248
    %v898 = vunpack.c.l.b16 %v249
    %v899 = vunpack.c.h.b16 %v249
    %v900 = vunpack.c.l.b16 %v250
    %v901 = vunpack.c.h.b16 %v250
    %v902 = vunpack.c.l.b16 %v251
    %v903 = vunpack.c.h.b16 %v251
    %v904 = vunpack.c.l.b16 %v252
    %v905 = vunpack.c.h.b16 %v252
    %v906 = vunpack.c.l.b16 %v253
    %v907 = vunpack.c.h.b16 %v253
    %v908 = vunpack.c.l.b16 %v254
    %v909 = vunpack.c.h.b16 %v254
    %v910 = vunpack.c.l.b16 %v255
    %v911 = vunpack.c.h.b16 %v255
    %v912 = vunpack.c.l.b16 %v256
    %v913 = vunpack.c.h.b16 %v256
    %v914 = vunpack.c.l.b16 %v257
    %v915 = vunpack.c.h.b16 %v257
    %v916 = vunpack.c.l.b16 %v258
    %v917 = vunpack.c.h.b16 %v258
    %v918 = vunpack.c.l.b16 %v259
    %v919 = vunpack.c.h.b16 %v259
    %v920 = vunpack.c.l.b16 %v260
    %v921 = vunpack.c.h.b16 %v260
    %v922 = vunpack.c.l.b16 %v261
    %v923 = vunpack.c.h.b16 %v261
    %v924 = vunpack.c.l.b16 %v262
    %v925 = vunpack.c.h.b16 %v262
    %v926 = vunpack.c.l.b16 %v263
    %v927 = vunpack.c.h.b16 %v263
    %v928 = vunpack.c.l.b16 %v264
    %v929 = vunpack.c.h.b16 %v264
    %v930 = vunpack.c.l.b16 %v265
    %v931 = vunpack.c.h.b16 %v265
    %v932 = vunpack.c.l.b16 %v266
    %v933 = vunpack.c.h.b16 %v266
    %v934 = vunpack.c.l.b16 %v267
    %v935 = vunpack.c.h.b16 %v267
    %v936 = vunpack.c.l.b16 %v268
    %v937 = vunpack.c.h.b16 %v268
    %v938 = vunpack.c.l.b16 %v269
    %v939 = vunpack.c.h.b16 %v269
    %v940 = vunpack.c.l.b16 %v270
    %v941 = vunpack.c.h.b16 %v270
    %v942 = vunpack.c.l.b16 %v271
    %v943 = vunpack.c.h.b16 %v271
    %v944 = vunpack.c.l.b16 %v272
    %v945 = vunpack.c.h.b16 %v272
    %v946 = vunpack.c.l.b16 %v273
    %v947 = vunpack.c.h.b16 %v273
    %v948 = vunpack.c.l.b16 %v274
    %v949 = vunpack.c.h.b16 %v274
    %v950 = vunpack.c.l.b16 %v275
    %v951 = vunpack.c.h.b16 %v275
    %v952 = vunpack.c.l.b16 %v276
    %v953 = vunpack.c.h.b16 %v276
    %v954 = vpack.c.b16 %v556, %v554
    %v955 = vpack.c.b16 %v557, %v555
    %v956 = vpack.c.b16 %v560, %v558
    %v957 = vpack.c.b16 %v561, %v559
    %v958 = vpack.c.b16 %v564, %v562
    %v959 = vpack.c.b16 %v565, %v563
    %v960 = vpack.c.b16 %v568, %v566
    %v961 = vpack.c.b16 %v569, %v567
    %v962 = vpack.c.b16 %v572, %v570
    %v963 = vpack.c.b16 %v573, %v571
    %v964 = vpack.c.b16 %v576, %v574
    %v965 = vpack.c.b16 %v577, %v575
    %v966 = vpack.c.b16 %v580, %v578
    %v967 = vpack.c.b16 %v581, %v579
    %v968 = vpack.c.b16 %v584, %v582
    %v969 = vpack.c.b16 %v585, %v583
    %v970 = vpack.c.b16 %v588, %v586
    %v971 = vpack.c.b16 %v589, %v587
    %v972 = vpack.c.b16 %v592, %v590
    %v973 = vpack.c.b16 %v593, %v591
    %v974 = vpack.c.b16 %v596, %v594
    %v975 = vpack.c.b16 %v597, %v595
    %v976 = vpack.c.b16 %v600, %v598
    %v977 = vpack.c.b16 %v601, %v599
    %v978 = vpack.c.b16 %v604, %v602
    %v979 = vpack.c.b16 %v605, %v603
    %v980 = vpack.c.b16 %v608, %v606
    %v981 = vpack.c.b16 %v609, %v607
    %v982 = vpack.c.b16 %v612, %v610
    %v983 = vpack.c.b16 %v613, %v611
    %v984 = vpack.c.b16 %v616, %v614
    %v985 = vpack.c.b16 %v617, %v615
    %v986 = vpack.c.b16 %v620, %v618
    %v987 = vpack.c.b16 %v621, %v619
    %v988 = vpack.c.b16 %v624, %v622
    %v989 = vpack.c.b16 %v625, %v623
    %v990 = vpack.c.b16 %v628, %v626
    %v991 = vpack.c.b16 %v629, %v627
    %v992 = vpack.c.b16 %v632, %v630
    %v993 = vpack.c.b16 %v633, %v631
    %v994 = vpack.c.b16 %v636, %v634
    %v995 = vpack.c.b16 %v637, %v635
    %v996 = vpack.c.b16 %v640, %v638
    %v997 = vpack.c.b16 %v641, %v639
    %v998 = vpack.c.b16 %v644, %v642
    %v999 = vpack.c.b16 %v645, %v643
    %v1000 = vpack.c.b16 %v648, %v646
    %v1001 = vpack.c.b16 %v649, %v647
    %v1002 = vpack.c.b16 %v652, %v650
    %v1003 = vpack.c.b16 %v653, %v651
    %v1004 = vpack.c.b16 %v656, %v654
    %v1005 = vpack.c.b16 %v657, %v655
    %v1006 = vpack.c.b16 %v660, %v658
    %v1007 = vpack.c.b16 %v661, %v659
    %v1008 = vpack.c.b16 %v664, %v662
    %v1009 = vpack.c.b16 %v665, %v663
    %v1010 = vpack.c.b16 %v668, %v666
    %v1011 = vpack.c.b16 %v669, %v667
    %v1012 = vpack.c.b16 %v672, %v670
    %v1013 = vpack.c.b16 %v673, %v671
    %v1014 = vpack.c.b16 %v676, %v674
    %v1015 = vpack.c.b16 %v677, %v675
    %v1016 = vpack.c.b16 %v680, %v678
    %v1017 = vpack.c.b16 %v681, %v679
    %v1018 = vpack.c.b16 %v684, %v682
    %v1019 = vpack.c.b16 %v685, %v683
    %v1020 = vpack.c.b16 %v688, %v686
    %v1021 = vpack.c.b16 %v689, %v687
    %v1022 = vpack.c.b16 %v692, %v690
    %v1023 = vpack.c.b16 %v693, %v691
    %v1024 = vpack.c.b16 %v696, %v694
    %v1025 = vpack.c.b16 %v697, %v695
    %v1026 = vpack.c.b16 %v700, %v698
    %v1027 = vpack.c.b16 %v701, %v699
    %v1028 = vpack.c.b16 %v704, %v702
    %v1029 = vpack.c.b16 %v705, %v703
    %v1030 = vpack.c.b16 %v708, %v706
    %v1031 = vpack.c.b16 %v709, %v707
    %v1032 = vpack.c.b16 %v712, %v710
    %v1033 = vpack.c.b16 %v713, %v711
    %v1034 = vpack.c.b16 %v716, %v714
    %v1035 = vpack.c.b16 %v717, %v715
    %v1036 = vpack.c.b16 %v720, %v718
    %v1037 = vpack.c.b16 %v721, %v719
    %v1038 = vpack.c.b16 %v724, %v722
    %v1039 = vpack.c.b16 %v725, %v723
    %v1040 = vpack.c.b16 %v728, %v726
    %v1041 = vpack.c.b16 %v729, %v727
    %v1042 = vpack.c.b16 %v732, %v730
    %v1043 = vpack.c.b16 %v733, %v731
    %v1044 = vpack.c.b16 %v736, %v734
    %v1045 = vpack.c.b16 %v737, %v735
    %v1046 = vpack.c.b16 %v740, %v738
    %v1047 = vpack.c.b16 %v741, %v739
    %v1048 = vpack.c.b16 %v744, %v742
    %v1049 = vpack.c.b16 %v745, %v743
    %v1050 = vpack.c.b16 %v748, %v746
    %v1051 = vpack.c.b16 %v749, %v747
    %v1052 = vpack.c.b16 %v752, %v750
    %v1053 = vpack.c.b16 %v753, %v751
    %v1054 = vpack.c.b16 %v756, %v754
    %v1055 = vpack.c.b16 %v757, %v755
    %v1056 = vpack.c.b16 %v760, %v758
    %v1057 = vpack.c.b16 %v761, %v759
    %v1058 = vpack.c.b16 %v764, %v762
    %v1059 = vpack.c.b16 %v765, %v763
    %v1060 = vpack.c.b16 %v768, %v766
    %v1061 = vpack.c.b16 %v769, %v767
    %v1062 = vpack.c.b16 %v772, %v770
    %v1063 = vpack.c.b16 %v773, %v771
    %v1064 = vpack.c.b16 %v776, %v774
    %v1065 = vpack.c.b16 %v777, %v775
    %v1066 = vpack.c.b16 %v780, %v778
    %v1067 = vpack.c.b16 %v781, %v779
    %v1068 = vpack.c.b16 %v784, %v782
    %v1069 = vpack.c.b16 %v785, %v783
    %v1070 = vpack.c.b16 %v788, %v786
    %v1071 = vpack.c.b16 %v789, %v787
    %v1072 = vpack.c.b16 %v792, %v790
    %v1073 = vpack.c.b16 %v793, %v791
    %v1074 = vpack.c.b16 %v796, %v794
    %v1075 = vpack.c.b16 %v797, %v795
    %v1076 = vpack.c.b16 %v800, %v798
    %v1077 = vpack.c.b16 %v801, %v799
    %v1078 = vpack.c.b16 %v804, %v802
    %v1079 = vpack.c.b16 %v805, %v803
    %v1080 = vpack.c.b16 %v808, %v806
    %v1081 = vpack.c.b16 %v809, %v807
    %v1082 = vpack.c.b16 %v812, %v810
    %v1083 = vpack.c.b16 %v813, %v811
    %v1084 = vpack.c.b16 %v816, %v814
    %v1085 = vpack.c.b16 %v817, %v815
    %v1086 = vpack.c.b16 %v820, %v818
    %v1087 = vpack.c.b16 %v821, %v819
    %v1088 = vpack.c.b16 %v824, %v822
    %v1089 = vpack.c.b16 %v825, %v823
    %v1090 = vpack.c.b16 %v828, %v826
    %v1091 = vpack.c.b16 %v829, %v827
    %v1092 = vpack.c.b16 %v832, %v830
    %v1093 = vpack.c.b16 %v833, %v831
    %v1094 = vpack.c.b16 %v836, %v834
    %v1095 = vpack.c.b16 %v837, %v835
    %v1096 = vpack.c.b16 %v840, %v838
    %v1097 = vpack.c.b16 %v841, %v839
    %v1098 = vpack.c.b16 %v844, %v842
    %v1099 = vpack.c.b16 %v845, %v843
    %v1100 = vpack.c.b16 %v848, %v846
    %v1101 = vpack.c.b16 %v849, %v847
    %v1102 = vpack.c.b16 %v852, %v850
    %v1103 = vpack.c.b16 %v853, %v851
    %v1104 = vpack.c.b16 %v856, %v854
    %v1105 = vpack.c.b16 %v857, %v855
    %v1106 = vpack.c.b16 %v860, %v858
    %v1107 = vpack.c.b16 %v861, %v859
    %v1108 = vpack.c.b16 %v864, %v862
    %v1109 = vpack.c.b16 %v865, %v863
    %v1110 = vpack.c.b16 %v868, %v866
    %v1111 = vpack.c.b16 %v869, %v867
    %v1112 = vpack.c.b16 %v872, %v870
    %v1113 = vpack.c.b16 %v873, %v871
    %v1114 = vpack.c.b16 %v876, %v874
    %v1115 = vpack.c.b16 %v877, %v875
    %v1116 = vpack.c.b16 %v880, %v878
    %v1117 = vpack.c.b16 %v881, %v879
    %v1118 = vpack.c.b16 %v884, %v882
    %v1119 = vpack.c.b16 %v885, %v883
    %v1120 = vpack.c.b16 %v888, %v886
    %v1121 = vpack.c.b16 %v889, %v887
    %v1122 = vpack.c.b16 %v892, %v890
    %v1123 = vpack.c.b16 %v893, %v891
    %v1124 = vpack.c.b16 %v896, %v894
    %v1125 = vpack.c.b16 %v897, %v895
    %v1126 = vpack.c.b16 %v900, %v898
    %v1127 = vpack.c.b16 %v901, %v899
    %v1128 = vpack.c.b16 %v904, %v902
    %v1129 = vpack.c.b16 %v905, %v903
    %v1130 = vpack.c.b16 %v908, %v906
    %v1131 = vpack.c.b16 %v909, %v907
    %v1132 = vpack.c.b16 %v912, %v910
    %v1133 = vpack.c.b16 %v913, %v911
    %v1134 = vpack.c.b16 %v916, %v914
    %v1135 = vpack.c.b16 %v917, %v915
    %v1136 = vpack.c.b16 %v920, %v918
    %v1137 = vpack.c.b16 %v921, %v919
    %v1138 = vpack.c.b16 %v924, %v922
    %v1139 = vpack.c.b16 %v925, %v923
    %v1140 = vpack.c.b16 %v928, %v926
    %v1141 = vpack.c.b16 %v929, %v927
    %v1142 = vpack.c.b16 %v932, %v930
    %v1143 = vpack.c.b16 %v933, %v931
    %v1144 = vpack.c.b16 %v936, %v934
    %v1145 = vpack.c.b16 %v937, %v935
    %v1146 = vpack.c.b16 %v940, %v938
    %v1147 = vpack.c.b16 %v941, %v939
    %v1148 = vpack.c.b16 %v944, %v942
    %v1149 = vpack.c.b16 %v945, %v943
    %v1150 = vpack.c.b16 %v948, %v946
    %v1151 = vpack.c.b16 %v949, %v947
    %v1152 = vpack.c.b16 %v952, %v950
    %v1153 = vpack.c.b16 %v953, %v951
    %vm1354 = vcmask 523264
    %v1356 = vsel %vm1354, %v341, 0
    %1358 = vmatprep.subr.bf16.mxu0 %v955
    %1359 = vmatpush1.bf16.msra.mxu0 %v954
    %1360 = vmatprep.subr.bf16.mxu0 %v957
    %1361 = vmatpush1.bf16.msra.mxu0 %v956
    %1362 = vmatprep.subr.bf16.mxu0 %v959
    %1363 = vmatpush1.bf16.msra.mxu0 %v958
    %1364 = vmatprep.subr.bf16.mxu0 %v961
    %1365 = vmatpush1.bf16.msra.mxu0 %v960
    %1366 = vmatprep.subr.bf16.mxu0 %v963
    %1367 = vmatpush1.bf16.msra.mxu0 %v962
    %1368 = vmatprep.subr.bf16.mxu0 %v965
    %1369 = vmatpush1.bf16.msra.mxu0 %v964
    %1370 = vmatprep.subr.bf16.mxu0 %v967
    %1371 = vmatpush1.bf16.msra.mxu0 %v966
    %1372 = vmatprep.subr.bf16.mxu0 %v969
    %1373 = vmatpush1.bf16.msra.mxu0 %v968
    %1374 = vmatprep.subr.bf16.mxu0 %v971
    %1375 = vmatpush1.bf16.msra.mxu0 %v970
    %1376 = vmatprep.subr.bf16.mxu0 %v973
    %1377 = vmatpush1.bf16.msra.mxu0 %v972
    %1378 = vmatprep.subr.bf16.mxu0 %v975
    %1379 = vmatpush1.bf16.msra.mxu0 %v974
    %1380 = vmatprep.subr.bf16.mxu0 %v977
    %1381 = vmatpush1.bf16.msra.mxu0 %v976
    %1382 = vmatprep.subr.bf16.mxu0 %v979
    %1383 = vmatpush1.bf16.msra.mxu0 %v978
    %1384 = vmatprep.subr.bf16.mxu0 %v981
    %1385 = vmatpush1.bf16.msra.mxu0 %v980
    %1386 = vmatprep.subr.bf16.mxu0 %v983
    %1387 = vmatpush1.bf16.msra.mxu0 %v982
    %1388 = vmatprep.subr.bf16.mxu0 %v985
    %1389 = vmatpush1.bf16.msra.mxu0 %v984
    %1390 = vmatprep.mubr.bf16.mxu0 %v330
    %1391 = vmatmul.mubr.bf16.gmra.mrb[0].mxu0 %v329
    %v1392 = vpop.f32.mrb[0].mxu0
    %v1393 = vadd.f32 %v282, %v1392
    %v1394 = vpop.f32.mrb[0].mxu0
    %v1395 = vadd.f32 %v286, %v1394
    %v1396 = vpop.f32.mrb[0].mxu0
    %v1397 = vadd.f32 %v282, %v1396
    %v1398 = vpop.f32.mrb[0].mxu0
    %v1399 = vadd.f32 %v286, %v1398
    %1400 = vdwg.mxu0
    %1401 = vmatprep.subr.bf16.mxu0 %v987
    %1402 = vmatpush1.bf16.msra.mxu0 %v986
    %1403 = vmatprep.subr.bf16.mxu0 %v989
    %1404 = vmatpush1.bf16.msra.mxu0 %v988
    %1405 = vmatprep.subr.bf16.mxu0 %v991
    %1406 = vmatpush1.bf16.msra.mxu0 %v990
    %1407 = vmatprep.subr.bf16.mxu0 %v993
    %1408 = vmatpush1.bf16.msra.mxu0 %v992
    %1409 = vmatprep.subr.bf16.mxu0 %v995
    %1410 = vmatpush1.bf16.msra.mxu0 %v994
    %1411 = vmatprep.subr.bf16.mxu0 %v997
    %1412 = vmatpush1.bf16.msra.mxu0 %v996
    %1413 = vmatprep.subr.bf16.mxu0 %v999
    %1414 = vmatpush1.bf16.msra.mxu0 %v998
    %1415 = vmatprep.subr.bf16.mxu0 %v1001
    %1416 = vmatpush1.bf16.msra.mxu0 %v1000
    %1417 = vmatprep.subr.bf16.mxu0 %v1003
    %1418 = vmatpush1.bf16.msra.mxu0 %v1002
    %1419 = vmatprep.subr.bf16.mxu0 %v1005
    %1420 = vmatpush1.bf16.msra.mxu0 %v1004
    %1421 = vmatprep.subr.bf16.mxu0 %v1007
    %1422 = vmatpush1.bf16.msra.mxu0 %v1006
    %1423 = vmatprep.subr.bf16.mxu0 %v1009
    %1424 = vmatpush1.bf16.msra.mxu0 %v1008
    %1425 = vmatprep.subr.bf16.mxu0 %v1011
    %1426 = vmatpush1.bf16.msra.mxu0 %v1010
    %1427 = vmatprep.subr.bf16.mxu0 %v1013
    %1428 = vmatpush1.bf16.msra.mxu0 %v1012
    %1429 = vmatprep.subr.bf16.mxu0 %v1015
    %1430 = vmatpush1.bf16.msra.mxu0 %v1014
    %1431 = vmatprep.subr.bf16.mxu0 %v1017
    %1432 = vmatpush1.bf16.msra.mxu0 %v1016
    %1433 = vmatprep.mubr.bf16.mxu0 %v332
    %1434 = vmatmul.mubr.bf16.gmra.mrb[0].mxu0 %v331
    %v1435 = vpop.f32.mrb[0].mxu0
    %v1436 = vadd.f32 %v1393, %v1435
    %v1437 = vpop.f32.mrb[0].mxu0
    %v1438 = vadd.f32 %v1395, %v1437
    %v1439 = vpop.f32.mrb[0].mxu0
    %v1440 = vadd.f32 %v1397, %v1439
    %v1441 = vpop.f32.mrb[0].mxu0
    %v1442 = vadd.f32 %v1399, %v1441
    %1443 = vdwg.mxu0
    %1444 = vmatprep.subr.bf16.mxu0 %v1019
    %1445 = vmatpush1.bf16.msra.mxu0 %v1018
    %1446 = vmatprep.subr.bf16.mxu0 %v1021
    %1447 = vmatpush1.bf16.msra.mxu0 %v1020
    %1448 = vmatprep.subr.bf16.mxu0 %v1023
    %1449 = vmatpush1.bf16.msra.mxu0 %v1022
    %1450 = vmatprep.subr.bf16.mxu0 %v1025
    %1451 = vmatpush1.bf16.msra.mxu0 %v1024
    %1452 = vmatprep.subr.bf16.mxu0 %v1027
    %1453 = vmatpush1.bf16.msra.mxu0 %v1026
    %1454 = vmatprep.subr.bf16.mxu0 %v1029
    %1455 = vmatpush1.bf16.msra.mxu0 %v1028
    %1456 = vmatprep.subr.bf16.mxu0 %v1031
    %1457 = vmatpush1.bf16.msra.mxu0 %v1030
    %1458 = vmatprep.subr.bf16.mxu0 %v1033
    %1459 = vmatpush1.bf16.msra.mxu0 %v1032
    %1460 = vmatprep.subr.bf16.mxu0 %v1035
    %1461 = vmatpush1.bf16.msra.mxu0 %v1034
    %1462 = vmatprep.subr.bf16.mxu0 %v1037
    %1463 = vmatpush1.bf16.msra.mxu0 %v1036
    %1464 = vmatprep.subr.bf16.mxu0 %v1039
    %1465 = vmatpush1.bf16.msra.mxu0 %v1038
    %1466 = vmatprep.subr.bf16.mxu0 %v1041
    %1467 = vmatpush1.bf16.msra.mxu0 %v1040
    %1468 = vmatprep.subr.bf16.mxu0 %v1043
    %1469 = vmatpush1.bf16.msra.mxu0 %v1042
    %1470 = vmatprep.subr.bf16.mxu0 %v1045
    %1471 = vmatpush1.bf16.msra.mxu0 %v1044
    %1472 = vmatprep.subr.bf16.mxu0 %v1047
    %1473 = vmatpush1.bf16.msra.mxu0 %v1046
    %1474 = vmatprep.subr.bf16.mxu0 %v1049
    %1475 = vmatpush1.bf16.msra.mxu0 %v1048
    %1476 = vmatprep.mubr.bf16.mxu0 %v334
    %1477 = vmatmul.mubr.bf16.gmra.mrb[0].mxu0 %v333
    %v1478 = vpop.f32.mrb[0].mxu0
    %v1479 = vadd.f32 %v1436, %v1478
    %v1480 = vpop.f32.mrb[0].mxu0
    %v1481 = vadd.f32 %v1438, %v1480
    %v1482 = vpop.f32.mrb[0].mxu0
    %v1483 = vadd.f32 %v1440, %v1482
    %v1484 = vpop.f32.mrb[0].mxu0
    %v1485 = vadd.f32 %v1442, %v1484
    %1486 = vdwg.mxu0
    %1487 = vmatprep.subr.bf16.mxu0 %v1051
    %1488 = vmatpush1.bf16.msra.mxu0 %v1050
    %1489 = vmatprep.subr.bf16.mxu0 %v1053
    %1490 = vmatpush1.bf16.msra.mxu0 %v1052
    %1491 = vmatprep.subr.bf16.mxu0 %v1055
    %1492 = vmatpush1.bf16.msra.mxu0 %v1054
    %1493 = vmatprep.subr.bf16.mxu0 %v1057
    %1494 = vmatpush1.bf16.msra.mxu0 %v1056
    %1495 = vmatprep.subr.bf16.mxu0 %v1059
    %1496 = vmatpush1.bf16.msra.mxu0 %v1058
    %1497 = vmatprep.subr.bf16.mxu0 %v1061
    %1498 = vmatpush1.bf16.msra.mxu0 %v1060
    %1499 = vmatprep.subr.bf16.mxu0 %v1063
    %1500 = vmatpush1.bf16.msra.mxu0 %v1062
    %1501 = vmatprep.subr.bf16.mxu0 %v1065
    %1502 = vmatpush1.bf16.msra.mxu0 %v1064
    %1503 = vmatprep.subr.bf16.mxu0 %v1067
    %1504 = vmatpush1.bf16.msra.mxu0 %v1066
    %1505 = vmatprep.subr.bf16.mxu0 %v1069
    %1506 = vmatpush1.bf16.msra.mxu0 %v1068
    %1507 = vmatprep.subr.bf16.mxu0 %v1071
    %1508 = vmatpush1.bf16.msra.mxu0 %v1070
    %1509 = vmatprep.subr.bf16.mxu0 %v1073
    %1510 = vmatpush1.bf16.msra.mxu0 %v1072
    %1511 = vmatprep.subr.bf16.mxu0 %v1075
    %1512 = vmatpush1.bf16.msra.mxu0 %v1074
    %1513 = vmatprep.subr.bf16.mxu0 %v1077
    %1514 = vmatpush1.bf16.msra.mxu0 %v1076
    %1515 = vmatprep.subr.bf16.mxu0 %v1079
    %1516 = vmatpush1.bf16.msra.mxu0 %v1078
    %1517 = vmatprep.subr.bf16.mxu0 %v1081
    %1518 = vmatpush1.bf16.msra.mxu0 %v1080
    %1519 = vmatprep.mubr.bf16.mxu0 %v336
    %1520 = vmatmul.mubr.bf16.gmra.mrb[0].mxu0 %v335
    %v1521 = vpop.f32.mrb[0].mxu0
    %v1522 = vadd.f32 %v1479, %v1521
    %v1523 = vpop.f32.mrb[0].mxu0
    %v1524 = vadd.f32 %v1481, %v1523
    %v1525 = vpop.f32.mrb[0].mxu0
    %v1526 = vadd.f32 %v1483, %v1525
    %v1527 = vpop.f32.mrb[0].mxu0
    %v1528 = vadd.f32 %v1485, %v1527
    %1529 = vdwg.mxu0
    %1530 = vmatprep.subr.bf16.mxu0 %v1083
    %1531 = vmatpush1.bf16.msra.mxu0 %v1082
    %1532 = vmatprep.subr.bf16.mxu0 %v1085
    %1533 = vmatpush1.bf16.msra.mxu0 %v1084
    %1534 = vmatprep.subr.bf16.mxu0 %v1087
    %1535 = vmatpush1.bf16.msra.mxu0 %v1086
    %1536 = vmatprep.subr.bf16.mxu0 %v1089
    %1537 = vmatpush1.bf16.msra.mxu0 %v1088
    %1538 = vmatprep.subr.bf16.mxu0 %v1091
    %1539 = vmatpush1.bf16.msra.mxu0 %v1090
    %1540 = vmatprep.subr.bf16.mxu0 %v1093
    %1541 = vmatpush1.bf16.msra.mxu0 %v1092
    %1542 = vmatprep.subr.bf16.mxu0 %v1095
    %1543 = vmatpush1.bf16.msra.mxu0 %v1094
    %1544 = vmatprep.subr.bf16.mxu0 %v1097
    %1545 = vmatpush1.bf16.msra.mxu0 %v1096
    %1546 = vmatprep.subr.bf16.mxu0 %v1099
    %1547 = vmatpush1.bf16.msra.mxu0 %v1098
    %1548 = vmatprep.subr.bf16.mxu0 %v1101
    %1549 = vmatpush1.bf16.msra.mxu0 %v1100
    %1550 = vmatprep.subr.bf16.mxu0 %v1103
    %1551 = vmatpush1.bf16.msra.mxu0 %v1102
    %1552 = vmatprep.subr.bf16.mxu0 %v1105
    %1553 = vmatpush1.bf16.msra.mxu0 %v1104
    %1554 = vmatprep.subr.bf16.mxu0 %v1107
    %1555 = vmatpush1.bf16.msra.mxu0 %v1106
    %1556 = vmatprep.subr.bf16.mxu0 %v1109
    %1557 = vmatpush1.bf16.msra.mxu0 %v1108
    %1558 = vmatprep.subr.bf16.mxu0 %v1111
    %1559 = vmatpush1.bf16.msra.mxu0 %v1110
    %1560 = vmatprep.subr.bf16.mxu0 %v1113
    %1561 = vmatpush1.bf16.msra.mxu0 %v1112
    %1562 = vmatprep.mubr.bf16.mxu0 %v338
    %1563 = vmatmul.mubr.bf16.gmra.mrb[0].mxu0 %v337
    %v1564 = vpop.f32.mrb[0].mxu0
    %v1565 = vadd.f32 %v1522, %v1564
    %v1566 = vpop.f32.mrb[0].mxu0
    %v1567 = vadd.f32 %v1524, %v1566
    %v1568 = vpop.f32.mrb[0].mxu0
    %v1569 = vadd.f32 %v1526, %v1568
    %v1570 = vpop.f32.mrb[0].mxu0
    %v1571 = vadd.f32 %v1528, %v1570
    %1572 = vdwg.mxu0
    %1573 = vmatprep.subr.bf16.mxu0 %v1115
    %1574 = vmatpush1.bf16.msra.mxu0 %v1114
    %1575 = vmatprep.subr.bf16.mxu0 %v1117
    %1576 = vmatpush1.bf16.msra.mxu0 %v1116
    %1577 = vmatprep.subr.bf16.mxu0 %v1119
    %1578 = vmatpush1.bf16.msra.mxu0 %v1118
    %1579 = vmatprep.subr.bf16.mxu0 %v1121
    %1580 = vmatpush1.bf16.msra.mxu0 %v1120
    %1581 = vmatprep.subr.bf16.mxu0 %v1123
    %1582 = vmatpush1.bf16.msra.mxu0 %v1122
    %1583 = vmatprep.subr.bf16.mxu0 %v1125
    %1584 = vmatpush1.bf16.msra.mxu0 %v1124
    %1585 = vmatprep.subr.bf16.mxu0 %v1127
    %1586 = vmatpush1.bf16.msra.mxu0 %v1126
    %1587 = vmatprep.subr.bf16.mxu0 %v1129
    %1588 = vmatpush1.bf16.msra.mxu0 %v1128
    %1589 = vmatprep.subr.bf16.mxu0 %v1131
    %1590 = vmatpush1.bf16.msra.mxu0 %v1130
    %1591 = vmatprep.subr.bf16.mxu0 %v1133
    %1592 = vmatpush1.bf16.msra.mxu0 %v1132
    %1593 = vmatprep.subr.bf16.mxu0 %v1135
    %1594 = vmatpush1.bf16.msra.mxu0 %v1134
    %1595 = vmatprep.subr.bf16.mxu0 %v1137
    %1596 = vmatpush1.bf16.msra.mxu0 %v1136
    %1597 = vmatprep.subr.bf16.mxu0 %v1139
    %1598 = vmatpush1.bf16.msra.mxu0 %v1138
    %1599 = vmatprep.subr.bf16.mxu0 %v1141
    %1600 = vmatpush1.bf16.msra.mxu0 %v1140
    %1601 = vmatprep.subr.bf16.mxu0 %v1143
    %1602 = vmatpush1.bf16.msra.mxu0 %v1142
    %1603 = vmatprep.subr.bf16.mxu0 %v1145
    %1604 = vmatpush1.bf16.msra.mxu0 %v1144
    %1605 = vmatprep.mubr.bf16.mxu0 %v340
    %1606 = vmatmul.mubr.bf16.gmra.mrb[0].mxu0 %v339
    %v1607 = vpop.f32.mrb[0].mxu0
    %v1608 = vadd.f32 %v1565, %v1607
    %v1609 = vpop.f32.mrb[0].mxu0
    %v1610 = vadd.f32 %v1567, %v1609
    %v1611 = vpop.f32.mrb[0].mxu0
    %v1612 = vadd.f32 %v1569, %v1611
    %v1613 = vpop.f32.mrb[0].mxu0
    %v1614 = vadd.f32 %v1571, %v1613
    %1615 = vdwg.mxu0
    %1616 = vmatprep.subr.bf16.mxu0 %v1147
    %1617 = vmatpush1.bf16.msra.mxu0 %v1146
    %1618 = vmatprep.subr.bf16.mxu0 %v1149
    %1619 = vmatpush1.bf16.msra.mxu0 %v1148
    %1620 = vmatprep.subr.bf16.mxu0 %v1151
    %1621 = vmatpush1.bf16.msra.mxu0 %v1150
    %1622 = vmatprep.subr.bf16.mxu0 %v1153
    %1623 = vmatpush1.bf16.msra.mxu0 %v1152
    %1624 = vmatprep.subr.bf16.mxu0 0
    %1625 = vmatpush1.bf16.msra.mxu0 0
    %1626 = vmatprep.subr.bf16.mxu0 0
    %1627 = vmatpush1.bf16.msra.mxu0 0
    %1628 = vmatprep.subr.bf16.mxu0 0
    %1629 = vmatpush1.bf16.msra.mxu0 0
    %1630 = vmatprep.subr.bf16.mxu0 0
    %1631 = vmatpush1.bf16.msra.mxu0 0
    %1632 = vmatprep.subr.bf16.mxu0 0
    %1633 = vmatpush1.bf16.msra.mxu0 0
    %1634 = vmatprep.subr.bf16.mxu0 0
    %1635 = vmatpush1.bf16.msra.mxu0 0
    %1636 = vmatprep.subr.bf16.mxu0 0
    %1637 = vmatpush1.bf16.msra.mxu0 0
    %1638 = vmatprep.subr.bf16.mxu0 0
    %1639 = vmatpush1.bf16.msra.mxu0 0
    %1640 = vmatprep.subr.bf16.mxu0 0
    %1641 = vmatpush1.bf16.msra.mxu0 0
    %1642 = vmatprep.subr.bf16.mxu0 0
    %1643 = vmatpush1.bf16.msra.mxu0 0
    %1644 = vmatprep.subr.bf16.mxu0 0
    %1645 = vmatpush1.bf16.msra.mxu0 0
    %1646 = vmatprep.subr.bf16.mxu0 0
    %1647 = vmatpush1.bf16.msra.mxu0 0
    %1648 = vmatprep.mubr.bf16.mxu0 0
    %1649 = vmatmul.mubr.bf16.gmra.mrb[0].mxu0 %v1356
    %v1650 = vpop.f32.mrb[0].mxu0
    %v1651 = vadd.f32 %v1608, %v1650
    %v1652 = vpop.f32.mrb[0].mxu0
    %v1653 = vadd.f32 %v1610, %v1652
    %v1654 = vpop.f32.mrb[0].mxu0
    %v1655 = vadd.f32 %v1612, %v1654
    %v1656 = vpop.f32.mrb[0].mxu0
    %v1657 = vadd.f32 %v1614, %v1656
    %1658 = vdwg.mxu0
    %v1659 = vmax.f32 %v1651, 0.0
    %v1660 = vmax.f32 %v1653, 0.0
    %v1661 = vmax.f32 %v1655, 0.0
    %v1662 = vmax.f32 %v1657, 0.0
    %v1663 = vld [vmem:[#allocation7] sm:$0xff]
    %v1664 = vld [vmem:[#allocation7 + $0x8] sm:$0xff]
    %v1665 = vld [vmem:[#allocation7 + $0x10] sm:$0xff]
    %v1666 = vld [vmem:[#allocation7 + $0x18] sm:$0xff]
    %v1667 = vld [vmem:[#allocation7 + $0x20] sm:$0xff]
    %v1668 = vld [vmem:[#allocation7 + $0x28] sm:$0xff]
    %v1669 = vld [vmem:[#allocation7 + $0x30] sm:$0xff]
    %v1670 = vld [vmem:[#allocation7 + $0x38] sm:$0xff]
    %v1671 = vld [vmem:[#allocation7 + $0x40] sm:$0xff]
    %v1672 = vld [vmem:[#allocation7 + $0x48] sm:$0xff]
    %v1673 = vld [vmem:[#allocation7 + $0x50] sm:$0xff]
    %v1674 = vld [vmem:[#allocation7 + $0x58] sm:$0xff]
    %v1675 = vld [vmem:[#allocation7 + $0x60] sm:$0xff]
    %v1676 = vld [vmem:[#allocation7 + $0x68] sm:$0xff]
    %v1677 = vld [vmem:[#allocation7 + $0x70] sm:$0xff]
    %v1678 = vld [vmem:[#allocation7 + $0x78] sm:$0xff]
    %v1679 = vld [vmem:[#allocation7 + $0x80] sm:$0xff]
    %v1680 = vld [vmem:[#allocation7 + $0x88] sm:$0xff]
    %v1681 = vld [vmem:[#allocation7 + $0x90] sm:$0xff]
    %v1682 = vld [vmem:[#allocation7 + $0x98] sm:$0xff]
    %v1683 = vld [vmem:[#allocation7 + $0xa0] sm:$0xff]
    %v1684 = vld [vmem:[#allocation7 + $0xa8] sm:$0xff]
    %v1685 = vld [vmem:[#allocation7 + $0xb0] sm:$0xff]
    %v1686 = vld [vmem:[#allocation7 + $0xb8] sm:$0xff]
    %v1687 = vld [vmem:[#allocation7 + $0xc0] sm:$0xff]
    %v1688 = vld [vmem:[#allocation7 + $0xc8] sm:$0xff]
    %v1689 = vld [vmem:[#allocation7 + $0xd0] sm:$0xff]
    %v1690 = vld [vmem:[#allocation7 + $0xd8] sm:$0xff]
    %v1691 = vld [vmem:[#allocation7 + $0xe0] sm:$0xff]
    %v1692 = vld [vmem:[#allocation7 + $0xe8] sm:$0xff]
    %v1693 = vld [vmem:[#allocation7 + $0xf0] sm:$0xff]
    %v1694 = vld [vmem:[#allocation7 + $0xf8] sm:$0xff]
    %v1695 = vld [vmem:[%s4] sm:$0x1]
    %v1697 = vlaneseq
    %v1698 = vshrl.u32 %v1697, 7
    %v1699 = vsub.s32 0, %v1698
    %v1700 = vrot.slane %v1695, %v1699
    %1702 = vmatprep.subr.mxu0 0.0
    %1703 = vmatpush1.msra.mxu0 %v1663
    %1704 = vmatprep.subr.mxu0 0.0
    %1705 = vmatpush1.msra.mxu0 %v1664
    %1706 = vmatprep.subr.mxu0 0.0
    %1707 = vmatpush1.msra.mxu0 %v1665
    %1708 = vmatprep.subr.mxu0 0.0
    %1709 = vmatpush1.msra.mxu0 %v1666
    %1710 = vmatprep.subr.mxu0 0.0
    %1711 = vmatpush1.msra.mxu0 %v1667
    %1712 = vmatprep.subr.mxu0 0.0
    %1713 = vmatpush1.msra.mxu0 %v1668
    %1714 = vmatprep.subr.mxu0 0.0
    %1715 = vmatpush1.msra.mxu0 %v1669
    %1716 = vmatprep.subr.mxu0 0.0
    %1717 = vmatpush1.msra.mxu0 %v1670
    %1718 = vmatprep.subr.mxu0 0.0
    %1719 = vmatpush1.msra.mxu0 %v1671
    %1720 = vmatprep.subr.mxu0 0.0
    %1721 = vmatpush1.msra.mxu0 %v1672
    %1722 = vmatprep.subr.mxu0 0.0
    %1723 = vmatpush1.msra.mxu0 %v1673
    %1724 = vmatprep.subr.mxu0 0.0
    %1725 = vmatpush1.msra.mxu0 %v1674
    %1726 = vmatprep.subr.mxu0 0.0
    %1727 = vmatpush1.msra.mxu0 %v1675
    %1728 = vmatprep.subr.mxu0 0.0
    %1729 = vmatpush1.msra.mxu0 %v1676
    %1730 = vmatprep.subr.mxu0 0.0
    %1731 = vmatpush1.msra.mxu0 %v1677
    %1732 = vmatprep.subr.mxu0 0.0
    %1733 = vmatpush1.msra.mxu0 %v1678
    %1734 = vmatprep.subr.mxu0 0.0
    %1735 = vmatpush1.msra.mxu0 %v1679
    %1736 = vmatprep.subr.mxu0 0.0
    %1737 = vmatpush1.msra.mxu0 %v1680
    %1738 = vmatprep.subr.mxu0 0.0
    %1739 = vmatpush1.msra.mxu0 %v1681
    %1740 = vmatprep.subr.mxu0 0.0
    %1741 = vmatpush1.msra.mxu0 %v1682
    %1742 = vmatprep.subr.mxu0 0.0
    %1743 = vmatpush1.msra.mxu0 %v1683
    %1744 = vmatprep.subr.mxu0 0.0
    %1745 = vmatpush1.msra.mxu0 %v1684
    %1746 = vmatprep.subr.mxu0 0.0
    %1747 = vmatpush1.msra.mxu0 %v1685
    %1748 = vmatprep.subr.mxu0 0.0
    %1749 = vmatpush1.msra.mxu0 %v1686
    %1750 = vmatprep.subr.mxu0 0.0
    %1751 = vmatpush1.msra.mxu0 %v1687
    %1752 = vmatprep.subr.mxu0 0.0
    %1753 = vmatpush1.msra.mxu0 %v1688
    %1754 = vmatprep.subr.mxu0 0.0
    %1755 = vmatpush1.msra.mxu0 %v1689
    %1756 = vmatprep.subr.mxu0 0.0
    %1757 = vmatpush1.msra.mxu0 %v1690
    %1758 = vmatprep.subr.mxu0 0.0
    %1759 = vmatpush1.msra.mxu0 %v1691
    %1760 = vmatprep.subr.mxu0 0.0
    %1761 = vmatpush1.msra.mxu0 %v1692
    %1762 = vmatprep.subr.mxu0 0.0
    %1763 = vmatpush1.msra.mxu0 %v1693
    %1764 = vmatprep.subr.mxu0 0.0
    %1765 = vmatpush1.msra.mxu0 %v1694
    %1766 = vmatprep.mubr.f32.mxu0 %v1660
    %1767 = vmatmul.mubr.f32.gmra.mrb[0].mxu0 %v1659
    %v1768 = vpop.f32.mrb[0].mxu0
    %v1769 = vadd.f32 %v1700, %v1768
    %v1770 = vpop.f32.mrb[0].mxu0
    %1771 = vmatprep.mubr.f32.mxu0 %v1662
    %1772 = vmatmul.mubr.f32.gmra.mrb[0].mxu0 %v1661
    %v1773 = vpop.f32.mrb[0].mxu0
    %v1774 = vadd.f32 %v1700, %v1773
    %v1775 = vpop.f32.mrb[0].mxu0
    %1776 = vdwg.mxu0
    %1777 = vmax.xlane.f32.xlu0 %v1769
    %v1778 = vpop.xlane.xlu0 %1777
    %1779 = vmax.xlane.f32.xlu0 %v1774
    %v1780 = vpop.xlane.xlu0 %1779
    %v1781 = vsub.f32 %v1769, %v1778
    %v1782 = vsub.f32 %v1774, %v1780
    %v1783 = vmul.f32 %v1781, 1.442695
    %v1784 = vpow.pop %v1783
    %v1785 = vmul.f32 %v1782, 1.442695
    %v1786 = vpow.pop %v1785
    %1787 = vadd.xlane.f32.xlu0 %v1784
    %v1788 = vpop.xlane.xlu0 %1787
    %1789 = vadd.xlane.f32.xlu0 %v1786
    %v1790 = vpop.xlane.xlu0 %1789
    %v1791 = vrcp.pop %v1788
    %v1792 = vmul.f32 %v1784, %v1791
    %v1793 = vrcp.pop %v1790
    %v1794 = vmul.f32 %v1786, %v1793
    %1795 = vst [vmem:[#allocation8] sm:$0xff] %v1792
    %1796 = vst [vmem:[#allocation8 + $0x8] sm:$0xff] %v1794
    // Predicated region
    $region34: #{tpu_custom_call.1} parent=1 // pred_check
      _
    $region35: #{tpu_custom_call.1} parent=1 // pred_check_branch
      %1798 = sbr.rel (0) target = $region37
    $region36: #{tpu_custom_call.1} parent=1 // pred_region
      %s1800 = ssub.s32 256, 256
      %1801 = vsyncadd [#allocation4], %s1800
      %s1802 = sshll.u32 [#allocation8], 4
      %s1803 = int_to_ptr.vmem [resolvable:$true] %s1802
      %1808 = dma.vmem_to_hbm [thread:$0]  %s1803, 256, %s5, [#allocation4], 128, 128, 8
    $region37: #{tpu_custom_call.1} parent=1 // pred_fallthru
      _
    // Predicated region
    $region38: #{tpu_custom_call.1} parent=1 // pred_check
      _
    $region39: #{tpu_custom_call.1} parent=1 // pred_check_branch
      %1810 = sbr.rel (0) target = $region41
    $region40: #{tpu_custom_call.1} parent=1 // pred_region
      %1811 = dma.done [#allocation4], 256
    $region41: #{tpu_custom_call.1} parent=1 // pred_fallthru
      _
    %1812 = vsyncpa [#allocation3], 1
    %1813 = vsyncpa [#allocation6], 1
    %1814 = vsyncpa [#allocation4], 1

</llo_original>
